<compile_context>
chip_gen: v6e
topology: v6e:2x2x1
jax: 0.10.0
libtpu: 0.0.40
codegen_flags: <defaults>
</compile_context>

<pallas_src>
import functools
import math

import jax
import jax.numpy as jnp
from jax.experimental import pallas as pl
from jax.experimental.pallas import tpu as pltpu

# Sizes implied by the hard-coded tensors in the PyTorch forward():
N_CAT = 18      # torch.zeros(1, 18)
N_INPUT = 59    # torch.zeros(1, 59)
HIDDEN = 32
OUTPUT = 59
COMBINED = N_CAT + N_INPUT + HIDDEN   # 109 = in_features of i2h / i2o
HO = HIDDEN + OUTPUT                  # 91  = in_features of o2o
OUT_PAD = 128                         # lane-dense logits slab width
T_BLK = 16                            # time steps per grid iteration
NEG_INF = -1e30                       # pad-lane bias (vanishes under max/exp)


def rnn_block_kernel(base_ref, bh_ref, whh_ref, wnew_ref, wold_ref, h0_ref,
                     out_ref, hid_ref, hold_sc, hnew_sc,
                     *, t_total: int, t_blk: int):
    """One block of t_blk time steps; grid axis 0 is the (sequential) time-block axis."""
    blk = pl.program_id(0)

    # Initialize the resident hidden carry from h0 on the first block.
    @pl.when(blk == 0)
    def _():
        hid_ref[...] = h0_ref[...]

    whh = whh_ref[...]                                # (HIDDEN, HIDDEN)
    b_rest = bh_ref[1:2, :]                           # (1, HIDDEN)
    # Bias for the very first step of the sequence (may include the category
    # term); only local step 0 of block 0 uses it.
    b_step0 = jnp.where(blk == 0, bh_ref[0:1, :], b_rest)

    needs_guard = (t_total % t_blk) != 0              # ragged tail?

    # ---- serial phase: hidden recurrence only --------------------------------
    h = hid_ref[...]                                  # (1, HIDDEN) carry-in
    for i in range(t_blk):                            # static unroll
        b = b_step0 if i == 0 else b_rest
        h_next = jnp.dot(h, whh, preferred_element_type=jnp.float32) + b
        if needs_guard:
            # freeze the carry on padded steps so final_hidden stays correct
            h_next = jnp.where(blk * t_blk + i < t_total, h_next, h)
        hold_sc[pl.ds(i, 1), :] = h                   # h_t   (old hidden)
        hnew_sc[pl.ds(i, 1), :] = h_next              # h_{t+1} (new hidden)
        h = h_next
    hid_ref[...] = h                                  # carry-out / final hidden

    # ---- batched epilogue: o2o + log-softmax over the whole block ------------
    # logits = h_new @ W_o2o[hidden rows] + h_old @ (W_i2o_hid @ W_o2o[out rows])
    #          + (b_i2o + cat@W_i2o_cat + x@W_i2o_inp) @ W_o2o[out rows] + b_o2o
    logits = (jnp.dot(hnew_sc[...], wnew_ref[...], preferred_element_type=jnp.float32)
              + jnp.dot(hold_sc[...], wold_ref[...], preferred_element_type=jnp.float32)
              + base_ref[...])                        # (t_blk, OUT_PAD)

    # TODO(synk): nn.Dropout(0.1) is stochastic; eval-mode (identity) semantics used.

    # LogSoftmax(dim=1); pad lanes carry -1e30 and vanish under max/exp.
    m = jnp.max(logits, axis=1, keepdims=True)
    lse = jnp.log(jnp.sum(jnp.exp(logits - m), axis=1, keepdims=True)) + m
    out_ref[...] = logits - lse


@functools.partial(jax.jit, static_argnames=("first_time_step",))
def rnn_forward_sequence(category, inputs, hidden0, raw, first_time_step=True):
    """Run T steps of iv_RNN.forward in a single pallas_call.

    category: (1, N_CAT); inputs: (T, N_INPUT); hidden0: (1, HIDDEN).
    raw: nn.Linear-style weights stored transposed as (in_features, out_features).
    Returns (log_probs (T, OUTPUT), final_hidden (1, HIDDEN)).
    """
    T = inputs.shape[0]
    n_blk = -(-T // T_BLK)
    t_pad = n_blk * T_BLK

    w_i2h, b_i2h = raw["w_i2h"], raw["b_i2h"]
    w_i2o, b_i2o = raw["w_i2o"], raw["b_i2o"]
    w_o2o, b_o2o = raw["w_o2o"], raw["b_o2o"]

    c0, c1 = N_CAT, N_CAT + N_INPUT   # COMBINED row layout: [category|input|hidden]

    # ---- hidden recurrence pieces (the only thing left on the serial chain) --
    w_hh = w_i2h[c1:]                                          # (HIDDEN, HIDDEN)
    bh_rest = b_i2h[None, :]                                   # (1, HIDDEN)
    if first_time_step:
        bh_first = bh_rest + category @ w_i2h[:c0]             # category -> i2h, step 0 only
    else:
        bh_first = bh_rest
    bh = jnp.concatenate([bh_first, bh_rest], axis=0)          # (2, HIDDEN)

    # ---- hoisted, batched contributions (one XLA matmul over all T steps) ----
    w2_h, w2_o = w_o2o[:HIDDEN], w_o2o[HIDDEN:]                # (32,59), (59,59)
    inputs_pad = jnp.pad(inputs, ((0, t_pad - T), (0, 0)))
    base_io = (b_i2o[None, :] + category @ w_i2o[:c0]
               + inputs_pad @ w_i2o[c0:c1])                    # (t_pad, OUTPUT)
    base_logits = base_io @ w2_o + b_o2o[None, :]              # (t_pad, OUTPUT)
    base_logits = jnp.concatenate(
        [base_logits,
         jnp.full((t_pad, OUT_PAD - OUTPUT), NEG_INF, jnp.float32)], axis=1)

    pad_cols = jnp.zeros((HIDDEN, OUT_PAD - OUTPUT), jnp.float32)
    w_new = jnp.concatenate([w2_h, pad_cols], axis=1)                  # (32, 128)
    w_old = jnp.concatenate([w_i2o[c1:] @ w2_o, pad_cols], axis=1)     # (32, 128)

    kernel = functools.partial(rnn_block_kernel, t_total=T, t_blk=T_BLK)
    resident = lambda shape: pl.BlockSpec(shape, lambda b: (0, 0))

    out_pad, final_hidden = pl.pallas_call(
        kernel,
        out_shape=(jax.ShapeDtypeStruct((t_pad, OUT_PAD), jnp.float32),
                   jax.ShapeDtypeStruct((1, HIDDEN), jnp.float32)),
        grid=(n_blk,),
        in_specs=[
            pl.BlockSpec((T_BLK, OUT_PAD), lambda b: (b, 0)),   # base_logits[block]
            resident((2, HIDDEN)),                              # bh (first / rest)
            resident((HIDDEN, HIDDEN)),                         # w_hh
            resident((HIDDEN, OUT_PAD)),                        # w_new
            resident((HIDDEN, OUT_PAD)),                        # w_old
            resident((1, HIDDEN)),                              # h0
        ],
        out_specs=(
            pl.BlockSpec((T_BLK, OUT_PAD), lambda b: (b, 0)),   # log-probs block
            pl.BlockSpec((1, HIDDEN), lambda b: (0, 0)),        # hidden carry
        ),
        scratch_shapes=[pltpu.VMEM((T_BLK, HIDDEN), jnp.float32),   # h_old trajectory
                        pltpu.VMEM((T_BLK, HIDDEN), jnp.float32)],  # h_new trajectory
        compiler_params=pltpu.CompilerParams(
            dimension_semantics=("arbitrary",)),                # sequential carry
    )(base_logits, bh, w_hh, w_new, w_old, hidden0)

    return out_pad[:T, :OUTPUT], final_hidden


def rnn_forward_step(category, inp, hidden, raw, first_time_step=True):
    """Single-step convenience wrapper (mirrors the module's forward signature)."""
    lp, h = rnn_forward_sequence(category, inp.reshape(1, N_INPUT), hidden,
                                 raw, first_time_step=first_time_step)
    return lp, h


# --------------------------- parameters ------------------------------------

def init_raw_params(key):
    """nn.Linear-style init, stored transposed as (in_features, out_features)."""
    ks = jax.random.split(key, 6)

    def lin(kw, kb, fan_in, fan_out):
        bound = 1.0 / math.sqrt(fan_in)
        w = jax.random.uniform(kw, (fan_in, fan_out), jnp.float32, -bound, bound)
        b = jax.random.uniform(kb, (fan_out,), jnp.float32, -bound, bound)
        return w, b

    w_i2h, b_i2h = lin(ks[0], ks[1], COMBINED, HIDDEN)
    w_i2o, b_i2o = lin(ks[2], ks[3], COMBINED, OUTPUT)
    w_o2o, b_o2o = lin(ks[4], ks[5], HO, OUTPUT)
    return {"w_i2h": w_i2h, "b_i2h": b_i2h,
            "w_i2o": w_i2o, "b_i2o": b_i2o,
            "w_o2o": w_o2o, "b_o2o": b_o2o}


# --------------------------- pure-JAX reference -----------------------------

def ref_forward_sequence(category, inputs, hidden0, raw, first_time_step=True):
    """Faithful pure-jnp port of the PyTorch forward (dropout = identity)."""
    hidden = hidden0
    outs = []
    first = first_time_step
    for t in range(inputs.shape[0]):
        if first:
            iv = jnp.concatenate(
                [category, jnp.zeros((1, N_INPUT), jnp.float32), hidden], axis=1)
            first = False
        else:
            iv = jnp.concatenate(
                [jnp.zeros((1, N_CAT), jnp.float32),
                 jnp.zeros((1, N_INPUT), jnp.float32), hidden], axis=1)
        ic = jnp.concatenate([category, inputs[t:t + 1], hidden], axis=1)
        h_new = iv @ raw["w_i2h"] + raw["b_i2h"]
        o = ic @ raw["w_i2o"] + raw["b_i2o"]
        oc = jnp.concatenate([h_new, o], axis=1)
        o = oc @ raw["w_o2o"] + raw["b_o2o"]
        o = jax.nn.log_softmax(o, axis=1)
        outs.append(o)
        hidden = h_new
    return jnp.concatenate(outs, axis=0), hidden


# --------------------------------- demo -------------------------------------

if __name__ == "__main__":
    key = jax.random.PRNGKey(0)
    k_params, k_cat, k_inp = jax.random.split(key, 3)

    raw = init_raw_params(k_params)

    category = jax.nn.one_hot(jax.random.randint(k_cat, (1,), 0, N_CAT),
                              N_CAT, dtype=jnp.float32)
    hidden0 = jnp.zeros((1, HIDDEN), jnp.float32)

    # Case 1: T = 32 (two full time blocks), first_time_step=True.
    T1 = 32
    inputs1 = jax.nn.one_hot(jax.random.randint(k_inp, (T1,), 0, N_INPUT),
                             N_INPUT, dtype=jnp.float32)
    lp1, h1 = rnn_forward_sequence(category, inputs1, hidden0, raw,
                                   first_time_step=True)
    jax.block_until_ready((lp1, h1))

    assert lp1.shape == (T1, OUTPUT)
    assert h1.shape == (1, HIDDEN)
    # log-softmax rows must (approximately) sum to 1 in prob space
    row_sums = jnp.sum(jnp.exp(lp1), axis=1)
    assert bool(jnp.all(jnp.abs(row_sums - 1.0) < 1e-4))

    ref_lp1, ref_h1 = ref_forward_sequence(category, inputs1, hidden0, raw,
                                           first_time_step=True)
    assert bool(jnp.allclose(lp1, ref_lp1, atol=5e-3, rtol=5e-3))
    assert bool(jnp.allclose(h1, ref_h1, atol=5e-3, rtol=5e-3))

    # Case 2: T = 19 (ragged tail -> padded block + guard), first_time_step=False.
    T2 = 19
    inputs2 = inputs1[:T2]
    lp2, h2 = rnn_forward_sequence(category, inputs2, hidden0, raw,
                                   first_time_step=False)
    jax.block_until_ready((lp2, h2))
    ref_lp2, ref_h2 = ref_forward_sequence(category, inputs2, hidden0, raw,
                                           first_time_step=False)
    assert lp2.shape == (T2, OUTPUT)
    assert bool(jnp.allclose(lp2, ref_lp2, atol=5e-3, rtol=5e-3))
    assert bool(jnp.allclose(h2, ref_h2, atol=5e-3, rtol=5e-3))

    print("KERNEL_OK")
</pallas_src>

<mosaic_0001>
module attributes {stable_mosaic.version = 11 : i64} {
  func.func @rnn_block_kernel(%arg0: i32, %arg1: memref<16x128xf32, #tpu.memory_space<vmem>>, %arg2: memref<2x32xf32, #tpu.memory_space<vmem>>, %arg3: memref<32x32xf32, #tpu.memory_space<vmem>>, %arg4: memref<32x128xf32, #tpu.memory_space<vmem>>, %arg5: memref<32x128xf32, #tpu.memory_space<vmem>>, %arg6: memref<1x32xf32, #tpu.memory_space<vmem>>, %arg7: memref<16x128xf32, #tpu.memory_space<vmem>>, %arg8: memref<1x32xf32, #tpu.memory_space<vmem>>, %arg9: memref<16x32xf32, #tpu.memory_space<vmem>>, %arg10: memref<16x32xf32, #tpu.memory_space<vmem>>) attributes {dimension_semantics = [#tpu.dimension_semantics<arbitrary>], iteration_bounds = array<i64: 2>, scalar_prefetch = 0 : i64, scratch_operands = 2 : i64, tpu.core_type = #tpu.core_type<tc>, window_params = [{transform_indices = @transform_0, window_bounds = array<i64: 16, 128>}, {pipeline_mode = #tpu.pipeline_mode<synchronous>, transform_indices = @transform_1, window_bounds = array<i64: 2, 32>}, {pipeline_mode = #tpu.pipeline_mode<synchronous>, transform_indices = @transform_2, window_bounds = array<i64: 32, 32>}, {pipeline_mode = #tpu.pipeline_mode<synchronous>, transform_indices = @transform_3, window_bounds = array<i64: 32, 128>}, {pipeline_mode = #tpu.pipeline_mode<synchronous>, transform_indices = @transform_4, window_bounds = array<i64: 32, 128>}, {pipeline_mode = #tpu.pipeline_mode<synchronous>, transform_indices = @transform_5, window_bounds = array<i64: 1, 32>}, {transform_indices = @transform_6, window_bounds = array<i64: 16, 128>}, {pipeline_mode = #tpu.pipeline_mode<synchronous>, transform_indices = @transform_7, window_bounds = array<i64: 1, 32>}]} {
    %c0_i32 = arith.constant 0 : i32
    %0 = arith.cmpi eq, %arg0, %c0_i32 : i32
    %1 = arith.extui %0 : i1 to i32
    %c0_i32_0 = arith.constant 0 : i32
    %2 = arith.cmpi ne, %1, %c0_i32_0 : i32
    scf.if %2 {
      %c0_91 = arith.constant 0 : index
      %c0_92 = arith.constant 0 : index
      %95 = vector.load %arg6[%c0_91, %c0_92] : memref<1x32xf32, #tpu.memory_space<vmem>>, vector<1x32xf32>
      %c0_93 = arith.constant 0 : index
      %c0_94 = arith.constant 0 : index
      %96 = vector.load %arg8[%c0_93, %c0_94] : memref<1x32xf32, #tpu.memory_space<vmem>>, vector<1x32xf32>
      tpu.vector_store %arg8[%c0_93, %c0_94], %95 {strides = array<i32>} : memref<1x32xf32, #tpu.memory_space<vmem>>, vector<1x32xf32>,
    } else {
    }
    %c0 = arith.constant 0 : index
    %c0_1 = arith.constant 0 : index
    %3 = vector.load %arg3[%c0, %c0_1] : memref<32x32xf32, #tpu.memory_space<vmem>>, vector<32x32xf32>
    %c1 = arith.constant 1 : index
    %c0_2 = arith.constant 0 : index
    %4 = vector.load %arg2[%c1, %c0_2] : memref<2x32xf32, #tpu.memory_space<vmem>>, vector<1x32xf32>
    %c0_i32_3 = arith.constant 0 : i32
    %5 = arith.cmpi eq, %arg0, %c0_i32_3 : i32
    %c0_4 = arith.constant 0 : index
    %c0_5 = arith.constant 0 : index
    %6 = vector.load %arg2[%c0_4, %c0_5] : memref<2x32xf32, #tpu.memory_space<vmem>>, vector<1x32xf32>
    %7 = arith.select %5, %6, %4 : vector<1x32xf32>
    %c0_6 = arith.constant 0 : index
    %c0_7 = arith.constant 0 : index
    %8 = vector.load %arg8[%c0_6, %c0_7] : memref<1x32xf32, #tpu.memory_space<vmem>>, vector<1x32xf32>
    %cst = arith.constant dense<0.000000e+00> : vector<1x32xf32>
    %9 = tpu.matmul %8, %3, %cst {dimension_numbers = #tpu.dot_dimension_numbers<[1], [0], [0], [1], [0, 0, 1, 1], [], []>} : vector<1x32xf32>, vector<32x32xf32>, vector<1x32xf32> -> vector<1x32xf32>
    %10 = arith.addf %9, %7 : vector<1x32xf32>
    %c0_8 = arith.constant 0 : index
    %c0_9 = arith.constant 0 : index
    %11 = vector.load %arg9[%c0_8, %c0_9] : memref<16x32xf32, #tpu.memory_space<vmem>>, vector<1x32xf32>
    tpu.vector_store %arg9[%c0_8, %c0_9], %8 {strides = array<i32>} : memref<16x32xf32, #tpu.memory_space<vmem>>, vector<1x32xf32>,
    %c0_10 = arith.constant 0 : index
    %c0_11 = arith.constant 0 : index
    %12 = vector.load %arg10[%c0_10, %c0_11] : memref<16x32xf32, #tpu.memory_space<vmem>>, vector<1x32xf32>
    tpu.vector_store %arg10[%c0_10, %c0_11], %10 {strides = array<i32>} : memref<16x32xf32, #tpu.memory_space<vmem>>, vector<1x32xf32>,
    %cst_12 = arith.constant dense<0.000000e+00> : vector<1x32xf32>
    %13 = tpu.matmul %10, %3, %cst_12 {dimension_numbers = #tpu.dot_dimension_numbers<[1], [0], [0], [1], [0, 0, 1, 1], [], []>} : vector<1x32xf32>, vector<32x32xf32>, vector<1x32xf32> -> vector<1x32xf32>
    %14 = arith.addf %13, %4 : vector<1x32xf32>
    %c1_13 = arith.constant 1 : index
    %c0_14 = arith.constant 0 : index
    %15 = vector.load %arg9[%c1_13, %c0_14] : memref<16x32xf32, #tpu.memory_space<vmem>>, vector<1x32xf32>
    tpu.vector_store %arg9[%c1_13, %c0_14], %10 {strides = array<i32>} : memref<16x32xf32, #tpu.memory_space<vmem>>, vector<1x32xf32>,
    %c1_15 = arith.constant 1 : index
    %c0_16 = arith.constant 0 : index
    %16 = vector.load %arg10[%c1_15, %c0_16] : memref<16x32xf32, #tpu.memory_space<vmem>>, vector<1x32xf32>
    tpu.vector_store %arg10[%c1_15, %c0_16], %14 {strides = array<i32>} : memref<16x32xf32, #tpu.memory_space<vmem>>, vector<1x32xf32>,
    %cst_17 = arith.constant dense<0.000000e+00> : vector<1x32xf32>
    %17 = tpu.matmul %14, %3, %cst_17 {dimension_numbers = #tpu.dot_dimension_numbers<[1], [0], [0], [1], [0, 0, 1, 1], [], []>} : vector<1x32xf32>, vector<32x32xf32>, vector<1x32xf32> -> vector<1x32xf32>
    %18 = arith.addf %17, %4 : vector<1x32xf32>
    %c2 = arith.constant 2 : index
    %c0_18 = arith.constant 0 : index
    %19 = vector.load %arg9[%c2, %c0_18] : memref<16x32xf32, #tpu.memory_space<vmem>>, vector<1x32xf32>
    tpu.vector_store %arg9[%c2, %c0_18], %14 {strides = array<i32>} : memref<16x32xf32, #tpu.memory_space<vmem>>, vector<1x32xf32>,
    %c2_19 = arith.constant 2 : index
    %c0_20 = arith.constant 0 : index
    %20 = vector.load %arg10[%c2_19, %c0_20] : memref<16x32xf32, #tpu.memory_space<vmem>>, vector<1x32xf32>
    tpu.vector_store %arg10[%c2_19, %c0_20], %18 {strides = array<i32>} : memref<16x32xf32, #tpu.memory_space<vmem>>, vector<1x32xf32>,
    %cst_21 = arith.constant dense<0.000000e+00> : vector<1x32xf32>
    %21 = tpu.matmul %18, %3, %cst_21 {dimension_numbers = #tpu.dot_dimension_numbers<[1], [0], [0], [1], [0, 0, 1, 1], [], []>} : vector<1x32xf32>, vector<32x32xf32>, vector<1x32xf32> -> vector<1x32xf32>
    %22 = arith.addf %21, %4 : vector<1x32xf32>
    %c3 = arith.constant 3 : index
    %c0_22 = arith.constant 0 : index
    %23 = vector.load %arg9[%c3, %c0_22] : memref<16x32xf32, #tpu.memory_space<vmem>>, vector<1x32xf32>
    tpu.vector_store %arg9[%c3, %c0_22], %18 {strides = array<i32>} : memref<16x32xf32, #tpu.memory_space<vmem>>, vector<1x32xf32>,
    %c3_23 = arith.constant 3 : index
    %c0_24 = arith.constant 0 : index
    %24 = vector.load %arg10[%c3_23, %c0_24] : memref<16x32xf32, #tpu.memory_space<vmem>>, vector<1x32xf32>
    tpu.vector_store %arg10[%c3_23, %c0_24], %22 {strides = array<i32>} : memref<16x32xf32, #tpu.memory_space<vmem>>, vector<1x32xf32>,
    %cst_25 = arith.constant dense<0.000000e+00> : vector<1x32xf32>
    %25 = tpu.matmul %22, %3, %cst_25 {dimension_numbers = #tpu.dot_dimension_numbers<[1], [0], [0], [1], [0, 0, 1, 1], [], []>} : vector<1x32xf32>, vector<32x32xf32>, vector<1x32xf32> -> vector<1x32xf32>
    %26 = arith.addf %25, %4 : vector<1x32xf32>
    %c4 = arith.constant 4 : index
    %c0_26 = arith.constant 0 : index
    %27 = vector.load %arg9[%c4, %c0_26] : memref<16x32xf32, #tpu.memory_space<vmem>>, vector<1x32xf32>
    tpu.vector_store %arg9[%c4, %c0_26], %22 {strides = array<i32>} : memref<16x32xf32, #tpu.memory_space<vmem>>, vector<1x32xf32>,
    %c4_27 = arith.constant 4 : index
    %c0_28 = arith.constant 0 : index
    %28 = vector.load %arg10[%c4_27, %c0_28] : memref<16x32xf32, #tpu.memory_space<vmem>>, vector<1x32xf32>
    tpu.vector_store %arg10[%c4_27, %c0_28], %26 {strides = array<i32>} : memref<16x32xf32, #tpu.memory_space<vmem>>, vector<1x32xf32>,
    %cst_29 = arith.constant dense<0.000000e+00> : vector<1x32xf32>
    %29 = tpu.matmul %26, %3, %cst_29 {dimension_numbers = #tpu.dot_dimension_numbers<[1], [0], [0], [1], [0, 0, 1, 1], [], []>} : vector<1x32xf32>, vector<32x32xf32>, vector<1x32xf32> -> vector<1x32xf32>
    %30 = arith.addf %29, %4 : vector<1x32xf32>
    %c5 = arith.constant 5 : index
    %c0_30 = arith.constant 0 : index
    %31 = vector.load %arg9[%c5, %c0_30] : memref<16x32xf32, #tpu.memory_space<vmem>>, vector<1x32xf32>
    tpu.vector_store %arg9[%c5, %c0_30], %26 {strides = array<i32>} : memref<16x32xf32, #tpu.memory_space<vmem>>, vector<1x32xf32>,
    %c5_31 = arith.constant 5 : index
    %c0_32 = arith.constant 0 : index
    %32 = vector.load %arg10[%c5_31, %c0_32] : memref<16x32xf32, #tpu.memory_space<vmem>>, vector<1x32xf32>
    tpu.vector_store %arg10[%c5_31, %c0_32], %30 {strides = array<i32>} : memref<16x32xf32, #tpu.memory_space<vmem>>, vector<1x32xf32>,
    %cst_33 = arith.constant dense<0.000000e+00> : vector<1x32xf32>
    %33 = tpu.matmul %30, %3, %cst_33 {dimension_numbers = #tpu.dot_dimension_numbers<[1], [0], [0], [1], [0, 0, 1, 1], [], []>} : vector<1x32xf32>, vector<32x32xf32>, vector<1x32xf32> -> vector<1x32xf32>
    %34 = arith.addf %33, %4 : vector<1x32xf32>
    %c6 = arith.constant 6 : index
    %c0_34 = arith.constant 0 : index
    %35 = vector.load %arg9[%c6, %c0_34] : memref<16x32xf32, #tpu.memory_space<vmem>>, vector<1x32xf32>
    tpu.vector_store %arg9[%c6, %c0_34], %30 {strides = array<i32>} : memref<16x32xf32, #tpu.memory_space<vmem>>, vector<1x32xf32>,
    %c6_35 = arith.constant 6 : index
    %c0_36 = arith.constant 0 : index
    %36 = vector.load %arg10[%c6_35, %c0_36] : memref<16x32xf32, #tpu.memory_space<vmem>>, vector<1x32xf32>
    tpu.vector_store %arg10[%c6_35, %c0_36], %34 {strides = array<i32>} : memref<16x32xf32, #tpu.memory_space<vmem>>, vector<1x32xf32>,
    %cst_37 = arith.constant dense<0.000000e+00> : vector<1x32xf32>
    %37 = tpu.matmul %34, %3, %cst_37 {dimension_numbers = #tpu.dot_dimension_numbers<[1], [0], [0], [1], [0, 0, 1, 1], [], []>} : vector<1x32xf32>, vector<32x32xf32>, vector<1x32xf32> -> vector<1x32xf32>
    %38 = arith.addf %37, %4 : vector<1x32xf32>
    %c7 = arith.constant 7 : index
    %c0_38 = arith.constant 0 : index
    %39 = vector.load %arg9[%c7, %c0_38] : memref<16x32xf32, #tpu.memory_space<vmem>>, vector<1x32xf32>
    tpu.vector_store %arg9[%c7, %c0_38], %34 {strides = array<i32>} : memref<16x32xf32, #tpu.memory_space<vmem>>, vector<1x32xf32>,
    %c7_39 = arith.constant 7 : index
    %c0_40 = arith.constant 0 : index
    %40 = vector.load %arg10[%c7_39, %c0_40] : memref<16x32xf32, #tpu.memory_space<vmem>>, vector<1x32xf32>
    tpu.vector_store %arg10[%c7_39, %c0_40], %38 {strides = array<i32>} : memref<16x32xf32, #tpu.memory_space<vmem>>, vector<1x32xf32>,
    %cst_41 = arith.constant dense<0.000000e+00> : vector<1x32xf32>
    %41 = tpu.matmul %38, %3, %cst_41 {dimension_numbers = #tpu.dot_dimension_numbers<[1], [0], [0], [1], [0, 0, 1, 1], [], []>} : vector<1x32xf32>, vector<32x32xf32>, vector<1x32xf32> -> vector<1x32xf32>
    %42 = arith.addf %41, %4 : vector<1x32xf32>
    %c8 = arith.constant 8 : index
    %c0_42 = arith.constant 0 : index
    %43 = vector.load %arg9[%c8, %c0_42] : memref<16x32xf32, #tpu.memory_space<vmem>>, vector<1x32xf32>
    tpu.vector_store %arg9[%c8, %c0_42], %38 {strides = array<i32>} : memref<16x32xf32, #tpu.memory_space<vmem>>, vector<1x32xf32>,
    %c8_43 = arith.constant 8 : index
    %c0_44 = arith.constant 0 : index
    %44 = vector.load %arg10[%c8_43, %c0_44] : memref<16x32xf32, #tpu.memory_space<vmem>>, vector<1x32xf32>
    tpu.vector_store %arg10[%c8_43, %c0_44], %42 {strides = array<i32>} : memref<16x32xf32, #tpu.memory_space<vmem>>, vector<1x32xf32>,
    %cst_45 = arith.constant dense<0.000000e+00> : vector<1x32xf32>
    %45 = tpu.matmul %42, %3, %cst_45 {dimension_numbers = #tpu.dot_dimension_numbers<[1], [0], [0], [1], [0, 0, 1, 1], [], []>} : vector<1x32xf32>, vector<32x32xf32>, vector<1x32xf32> -> vector<1x32xf32>
    %46 = arith.addf %45, %4 : vector<1x32xf32>
    %c9 = arith.constant 9 : index
    %c0_46 = arith.constant 0 : index
    %47 = vector.load %arg9[%c9, %c0_46] : memref<16x32xf32, #tpu.memory_space<vmem>>, vector<1x32xf32>
    tpu.vector_store %arg9[%c9, %c0_46], %42 {strides = array<i32>} : memref<16x32xf32, #tpu.memory_space<vmem>>, vector<1x32xf32>,
    %c9_47 = arith.constant 9 : index
    %c0_48 = arith.constant 0 : index
    %48 = vector.load %arg10[%c9_47, %c0_48] : memref<16x32xf32, #tpu.memory_space<vmem>>, vector<1x32xf32>
    tpu.vector_store %arg10[%c9_47, %c0_48], %46 {strides = array<i32>} : memref<16x32xf32, #tpu.memory_space<vmem>>, vector<1x32xf32>,
    %cst_49 = arith.constant dense<0.000000e+00> : vector<1x32xf32>
    %49 = tpu.matmul %46, %3, %cst_49 {dimension_numbers = #tpu.dot_dimension_numbers<[1], [0], [0], [1], [0, 0, 1, 1], [], []>} : vector<1x32xf32>, vector<32x32xf32>, vector<1x32xf32> -> vector<1x32xf32>
    %50 = arith.addf %49, %4 : vector<1x32xf32>
    %c10 = arith.constant 10 : index
    %c0_50 = arith.constant 0 : index
    %51 = vector.load %arg9[%c10, %c0_50] : memref<16x32xf32, #tpu.memory_space<vmem>>, vector<1x32xf32>
    tpu.vector_store %arg9[%c10, %c0_50], %46 {strides = array<i32>} : memref<16x32xf32, #tpu.memory_space<vmem>>, vector<1x32xf32>,
    %c10_51 = arith.constant 10 : index
    %c0_52 = arith.constant 0 : index
    %52 = vector.load %arg10[%c10_51, %c0_52] : memref<16x32xf32, #tpu.memory_space<vmem>>, vector<1x32xf32>
    tpu.vector_store %arg10[%c10_51, %c0_52], %50 {strides = array<i32>} : memref<16x32xf32, #tpu.memory_space<vmem>>, vector<1x32xf32>,
    %cst_53 = arith.constant dense<0.000000e+00> : vector<1x32xf32>
    %53 = tpu.matmul %50, %3, %cst_53 {dimension_numbers = #tpu.dot_dimension_numbers<[1], [0], [0], [1], [0, 0, 1, 1], [], []>} : vector<1x32xf32>, vector<32x32xf32>, vector<1x32xf32> -> vector<1x32xf32>
    %54 = arith.addf %53, %4 : vector<1x32xf32>
    %c11 = arith.constant 11 : index
    %c0_54 = arith.constant 0 : index
    %55 = vector.load %arg9[%c11, %c0_54] : memref<16x32xf32, #tpu.memory_space<vmem>>, vector<1x32xf32>
    tpu.vector_store %arg9[%c11, %c0_54], %50 {strides = array<i32>} : memref<16x32xf32, #tpu.memory_space<vmem>>, vector<1x32xf32>,
    %c11_55 = arith.constant 11 : index
    %c0_56 = arith.constant 0 : index
    %56 = vector.load %arg10[%c11_55, %c0_56] : memref<16x32xf32, #tpu.memory_space<vmem>>, vector<1x32xf32>
    tpu.vector_store %arg10[%c11_55, %c0_56], %54 {strides = array<i32>} : memref<16x32xf32, #tpu.memory_space<vmem>>, vector<1x32xf32>,
    %cst_57 = arith.constant dense<0.000000e+00> : vector<1x32xf32>
    %57 = tpu.matmul %54, %3, %cst_57 {dimension_numbers = #tpu.dot_dimension_numbers<[1], [0], [0], [1], [0, 0, 1, 1], [], []>} : vector<1x32xf32>, vector<32x32xf32>, vector<1x32xf32> -> vector<1x32xf32>
    %58 = arith.addf %57, %4 : vector<1x32xf32>
    %c12 = arith.constant 12 : index
    %c0_58 = arith.constant 0 : index
    %59 = vector.load %arg9[%c12, %c0_58] : memref<16x32xf32, #tpu.memory_space<vmem>>, vector<1x32xf32>
    tpu.vector_store %arg9[%c12, %c0_58], %54 {strides = array<i32>} : memref<16x32xf32, #tpu.memory_space<vmem>>, vector<1x32xf32>,
    %c12_59 = arith.constant 12 : index
    %c0_60 = arith.constant 0 : index
    %60 = vector.load %arg10[%c12_59, %c0_60] : memref<16x32xf32, #tpu.memory_space<vmem>>, vector<1x32xf32>
    tpu.vector_store %arg10[%c12_59, %c0_60], %58 {strides = array<i32>} : memref<16x32xf32, #tpu.memory_space<vmem>>, vector<1x32xf32>,
    %cst_61 = arith.constant dense<0.000000e+00> : vector<1x32xf32>
    %61 = tpu.matmul %58, %3, %cst_61 {dimension_numbers = #tpu.dot_dimension_numbers<[1], [0], [0], [1], [0, 0, 1, 1], [], []>} : vector<1x32xf32>, vector<32x32xf32>, vector<1x32xf32> -> vector<1x32xf32>
    %62 = arith.addf %61, %4 : vector<1x32xf32>
    %c13 = arith.constant 13 : index
    %c0_62 = arith.constant 0 : index
    %63 = vector.load %arg9[%c13, %c0_62] : memref<16x32xf32, #tpu.memory_space<vmem>>, vector<1x32xf32>
    tpu.vector_store %arg9[%c13, %c0_62], %58 {strides = array<i32>} : memref<16x32xf32, #tpu.memory_space<vmem>>, vector<1x32xf32>,
    %c13_63 = arith.constant 13 : index
    %c0_64 = arith.constant 0 : index
    %64 = vector.load %arg10[%c13_63, %c0_64] : memref<16x32xf32, #tpu.memory_space<vmem>>, vector<1x32xf32>
    tpu.vector_store %arg10[%c13_63, %c0_64], %62 {strides = array<i32>} : memref<16x32xf32, #tpu.memory_space<vmem>>, vector<1x32xf32>,
    %cst_65 = arith.constant dense<0.000000e+00> : vector<1x32xf32>
    %65 = tpu.matmul %62, %3, %cst_65 {dimension_numbers = #tpu.dot_dimension_numbers<[1], [0], [0], [1], [0, 0, 1, 1], [], []>} : vector<1x32xf32>, vector<32x32xf32>, vector<1x32xf32> -> vector<1x32xf32>
    %66 = arith.addf %65, %4 : vector<1x32xf32>
    %c14 = arith.constant 14 : index
    %c0_66 = arith.constant 0 : index
    %67 = vector.load %arg9[%c14, %c0_66] : memref<16x32xf32, #tpu.memory_space<vmem>>, vector<1x32xf32>
    tpu.vector_store %arg9[%c14, %c0_66], %62 {strides = array<i32>} : memref<16x32xf32, #tpu.memory_space<vmem>>, vector<1x32xf32>,
    %c14_67 = arith.constant 14 : index
    %c0_68 = arith.constant 0 : index
    %68 = vector.load %arg10[%c14_67, %c0_68] : memref<16x32xf32, #tpu.memory_space<vmem>>, vector<1x32xf32>
    tpu.vector_store %arg10[%c14_67, %c0_68], %66 {strides = array<i32>} : memref<16x32xf32, #tpu.memory_space<vmem>>, vector<1x32xf32>,
    %cst_69 = arith.constant dense<0.000000e+00> : vector<1x32xf32>
    %69 = tpu.matmul %66, %3, %cst_69 {dimension_numbers = #tpu.dot_dimension_numbers<[1], [0], [0], [1], [0, 0, 1, 1], [], []>} : vector<1x32xf32>, vector<32x32xf32>, vector<1x32xf32> -> vector<1x32xf32>
    %70 = arith.addf %69, %4 : vector<1x32xf32>
    %c15 = arith.constant 15 : index
    %c0_70 = arith.constant 0 : index
    %71 = vector.load %arg9[%c15, %c0_70] : memref<16x32xf32, #tpu.memory_space<vmem>>, vector<1x32xf32>
    tpu.vector_store %arg9[%c15, %c0_70], %66 {strides = array<i32>} : memref<16x32xf32, #tpu.memory_space<vmem>>, vector<1x32xf32>,
    %c15_71 = arith.constant 15 : index
    %c0_72 = arith.constant 0 : index
    %72 = vector.load %arg10[%c15_71, %c0_72] : memref<16x32xf32, #tpu.memory_space<vmem>>, vector<1x32xf32>
    tpu.vector_store %arg10[%c15_71, %c0_72], %70 {strides = array<i32>} : memref<16x32xf32, #tpu.memory_space<vmem>>, vector<1x32xf32>,
    %c0_73 = arith.constant 0 : index
    %c0_74 = arith.constant 0 : index
    %73 = vector.load %arg8[%c0_73, %c0_74] : memref<1x32xf32, #tpu.memory_space<vmem>>, vector<1x32xf32>
    tpu.vector_store %arg8[%c0_73, %c0_74], %70 {strides = array<i32>} : memref<1x32xf32, #tpu.memory_space<vmem>>, vector<1x32xf32>,
    %c0_75 = arith.constant 0 : index
    %c0_76 = arith.constant 0 : index
    %74 = vector.load %arg10[%c0_75, %c0_76] : memref<16x32xf32, #tpu.memory_space<vmem>>, vector<16x32xf32>
    %c0_77 = arith.constant 0 : index
    %c0_78 = arith.constant 0 : index
    %75 = vector.load %arg4[%c0_77, %c0_78] : memref<32x128xf32, #tpu.memory_space<vmem>>, vector<32x128xf32>
    %cst_79 = arith.constant dense<0.000000e+00> : vector<16x128xf32>
    %76 = tpu.matmul %74, %75, %cst_79 {dimension_numbers = #tpu.dot_dimension_numbers<[1], [0], [0], [1], [0, 0, 1, 1], [], []>} : vector<16x32xf32>, vector<32x128xf32>, vector<16x128xf32> -> vector<16x128xf32>
    %c0_80 = arith.constant 0 : index
    %c0_81 = arith.constant 0 : index
    %77 = vector.load %arg9[%c0_80, %c0_81] : memref<16x32xf32, #tpu.memory_space<vmem>>, vector<16x32xf32>
    %c0_82 = arith.constant 0 : index
    %c0_83 = arith.constant 0 : index
    %78 = vector.load %arg5[%c0_82, %c0_83] : memref<32x128xf32, #tpu.memory_space<vmem>>, vector<32x128xf32>
    %cst_84 = arith.constant dense<0.000000e+00> : vector<16x128xf32>
    %79 = tpu.matmul %77, %78, %cst_84 {dimension_numbers = #tpu.dot_dimension_numbers<[1], [0], [0], [1], [0, 0, 1, 1], [], []>} : vector<16x32xf32>, vector<32x128xf32>, vector<16x128xf32> -> vector<16x128xf32>
    %80 = arith.addf %76, %79 : vector<16x128xf32>
    %c0_85 = arith.constant 0 : index
    %c0_86 = arith.constant 0 : index
    %81 = vector.load %arg1[%c0_85, %c0_86] : memref<16x128xf32, #tpu.memory_space<vmem>>, vector<16x128xf32>
    %82 = arith.addf %80, %81 : vector<16x128xf32>
    %cst_87 = arith.constant dense<0xFF800000> : vector<16xf32>
    %83 = vector.multi_reduction <maximumf>, %82, %cst_87 [1] : vector<16x128xf32> to vector<16xf32>
    %84 = vector.shape_cast %83 : vector<16xf32> to vector<16x1xf32>
    %85 = vector.broadcast %84 : vector<16x1xf32> to vector<16x128xf32>
    %86 = arith.subf %82, %85 : vector<16x128xf32>
    %87 = math.exp %86 : vector<16x128xf32>
    %cst_88 = arith.constant dense<0.000000e+00> : vector<16xf32>
    %88 = vector.multi_reduction <add>, %87, %cst_88 [1] : vector<16x128xf32> to vector<16xf32>
    %89 = vector.shape_cast %88 : vector<16xf32> to vector<16x1xf32>
    %90 = math.log %89 : vector<16x1xf32>
    %91 = arith.addf %90, %84 : vector<16x1xf32>
    %92 = vector.broadcast %91 : vector<16x1xf32> to vector<16x128xf32>
    %93 = arith.subf %82, %92 : vector<16x128xf32>
    %c0_89 = arith.constant 0 : index
    %c0_90 = arith.constant 0 : index
    %94 = vector.load %arg7[%c0_89, %c0_90] : memref<16x128xf32, #tpu.memory_space<vmem>>, vector<16x128xf32>
    tpu.vector_store %arg7[%c0_89, %c0_90], %93 {strides = array<i32>} : memref<16x128xf32, #tpu.memory_space<vmem>>, vector<16x128xf32>,
    return
  }
  func.func @transform_0(%arg0: i32) -> (i32, i32) {
    %c0_i32 = arith.constant 0 : i32
    %c0_i32_0 = arith.constant 0 : i32
    return %arg0, %c0_i32 : i32, i32
  }
  func.func @transform_1(%arg0: i32) -> (i32, i32) {
    %c0_i32 = arith.constant 0 : i32
    %c0_i32_0 = arith.constant 0 : i32
    %c0_i32_1 = arith.constant 0 : i32
    return %c0_i32, %c0_i32_0 : i32, i32
  }
  func.func @transform_2(%arg0: i32) -> (i32, i32) {
    %c0_i32 = arith.constant 0 : i32
    %c0_i32_0 = arith.constant 0 : i32
    %c0_i32_1 = arith.constant 0 : i32
    return %c0_i32, %c0_i32_0 : i32, i32
  }
  func.func @transform_3(%arg0: i32) -> (i32, i32) {
    %c0_i32 = arith.constant 0 : i32
    %c0_i32_0 = arith.constant 0 : i32
    %c0_i32_1 = arith.constant 0 : i32
    return %c0_i32, %c0_i32_0 : i32, i32
  }
  func.func @transform_4(%arg0: i32) -> (i32, i32) {
    %c0_i32 = arith.constant 0 : i32
    %c0_i32_0 = arith.constant 0 : i32
    %c0_i32_1 = arith.constant 0 : i32
    return %c0_i32, %c0_i32_0 : i32, i32
  }
  func.func @transform_5(%arg0: i32) -> (i32, i32) {
    %c0_i32 = arith.constant 0 : i32
    %c0_i32_0 = arith.constant 0 : i32
    %c0_i32_1 = arith.constant 0 : i32
    return %c0_i32, %c0_i32_0 : i32, i32
  }
  func.func @transform_6(%arg0: i32) -> (i32, i32) {
    %c0_i32 = arith.constant 0 : i32
    %c0_i32_0 = arith.constant 0 : i32
    return %arg0, %c0_i32 : i32, i32
  }
  func.func @transform_7(%arg0: i32) -> (i32, i32) {
    %c0_i32 = arith.constant 0 : i32
    %c0_i32_0 = arith.constant 0 : i32
    %c0_i32_1 = arith.constant 0 : i32
    return %c0_i32, %c0_i32_0 : i32, i32
  }
}

</mosaic_0001>

<llo_original>
// kernel: rnn_forward_sequence.1
$region0: #{rnn_forward_sequence.1}
  #allocation0 [shape = 'u32[]', space=smem, size = 0x4, offset = 0x4, fixed_abs, tag = 'smem constant byte address 0x4 - core index']
  #allocation1 [shape = 'u32[144,128]{1,0:T(1,128)}', space=vmem, size = 0x12000, scoped, tag = 'internal scratch']
  #allocation2 [shape = 'f32[16,32]{1,0:T(8,128)}', space=vmem, size = 0x2000, scoped, tag = 'scratch operand']
  #allocation3 [shape = 'f32[16,32]{1,0:T(8,128)}', space=vmem, size = 0x2000, scoped, tag = 'scratch operand']
  %s0 = inlined_call_operand.vmem [shape: f32[32,128], index: 0, kind: input, shape index: {}]
  %s1 = inlined_call_operand.vmem [shape: f32[2,32], index: 1, kind: input, shape index: {}]
  %s2 = inlined_call_operand.vmem [shape: f32[32,32], index: 2, kind: input, shape index: {}]
  %s3 = inlined_call_operand.vmem [shape: f32[32,128], index: 3, kind: input, shape index: {}]
  %s4 = inlined_call_operand.vmem [shape: f32[32,128], index: 4, kind: input, shape index: {}]
  %s5 = inlined_call_operand.vmem [shape: f32[1,32], index: 5, kind: input, shape index: {}]
  %s6 = inlined_call_operand.hbm [shape: f32[32,128], index: 6, kind: output, shape index: {0}]
  %s7 = inlined_call_operand.hbm [shape: f32[1,32], index: 7, kind: output, shape index: {1}]
  %8 = xla_tuple %s6, %s7
  %s9 = sld [smem:[#allocation0]]
  $region69: #{rnn_forward_sequence.1} parent=0
    _
  %s11 = ssub.s32 1, %s9
  %s12 = scalar_select 0, %s11, %s9
  $region1: #{rnn_forward_sequence.1} parent=0
    #allocation4 [shape = 'u8[16384]{0}', space=vmem, size = 0x4000, scoped, tag = 'output window, operand 0']
    #allocation5 [shape = 's32[2]{0}', space=sflag, size = 0x8, scoped, tag = 'scoped memory for rnn_forward_sequence.1']
    #allocation6 [shape = 'u8[512]{0}', space=vmem, size = 0x400, scoped, tag = 'output window, operand 1, single buffered']
    #allocation7 [shape = 's32[1]{0}', space=sflag, size = 0x4, scoped, tag = 'scoped memory for rnn_forward_sequence.1']
    %13 = vsyncpa [#allocation5], 0
    %s14 = scalar_lea.sflag [#allocation5], 1
    %15 = vsyncpa %s14, 0
    %16 = vsyncpa [#allocation7], 0
    loop: start=0, step=1, limit=4
    $region2: #{rnn_forward_sequence.1} parent=1 // loop_pre_header
      _
    $region3: #{rnn_forward_sequence.1} parent=1 // loop_header
      %s18 = sphi 0, %s22
      %p19 = scmp.ge.s32.totalorder %s18, 4
      %s28 = sphi 0, %s30
      %s31 = sphi 0, %s28
      %s32 = sphi 0, %s31
      %s48 = sphi 0, %s32
      %s52 = sphi 0, %s52
      %s54 = sphi 0, %s52
      %s55 = sphi 0, %s54
      %s69 = sphi 0, %s55
      %s73 = sphi 0, %s73
      %s75 = sphi 0, %s73
      %s76 = sphi 0, %s75
      %s90 = sphi 0, %s76
      %s94 = sphi 0, %s94
      %s96 = sphi 0, %s94
      %s97 = sphi 0, %s96
      %s111 = sphi 0, %s97
      %s115 = sphi 0, %s115
      %s117 = sphi 0, %s115
      %s118 = sphi 0, %s117
      %s132 = sphi 0, %s118
      %s136 = sphi 0, %s136
      %s138 = sphi 0, %s136
      %s139 = sphi 0, %s138
      %s153 = sphi 0, %s139
      %s159 = sphi 0, %s161
      %s162 = sphi 0, %s159
      %s163 = sphi 0, %s162
      %s179 = sphi 0, %s163
      %s183 = sphi 0, %s183
      %s185 = sphi 0, %s183
      %s186 = sphi 0, %s185
      %s200 = sphi 0, %s186
    $region4: #{rnn_forward_sequence.1} parent=1 // loop_header_branch
      %21 = sbr.rel (%p19) target = $region8
    $region5: #{rnn_forward_sequence.1} parent=1 // loop_body
      %s23 = ssub.s32 %s18, 1
      %s24 = ssub.s32 %s18, 2
      %s25 = sadd.s32 %s18, 1
      %s26 = ssub.s32 %s18, %s25
      %p27 = scmp.eq.s32.totalorder %s26, 0
      %s29 = sadd.s32 %s28, 1
      %s30 = scalar_select %p27, %s28, %s29
      %p33 = pneg %p27
      %p34 = scmp.eq.s32.totalorder %s18, 1
      %p35 = por %p33, %p34
      %p36 = scmp.ne.s32.totalorder %s28, %s31
      %p37 = scmp.eq.s32.totalorder %s18, 0
      %p38 = por %p36, %p37
      %p39 = scmp.ne.s32.totalorder %s28, %s31
      %p40 = scmp.eq.s32.totalorder %s23, 1
      %p41 = por %p39, %p40
      %p42 = scmp.ne.s32.totalorder %s31, %s32
      %p43 = scmp.eq.s32.totalorder %s23, 0
      %p44 = por %p42, %p43
      %p45 = scmp.ne.s32.totalorder %s31, %s32
      %p46 = scmp.eq.s32.totalorder %s24, 1
      %p47 = por %p45, %p46
      %p49 = scmp.ne.s32.totalorder %s32, %s48
      %p50 = scmp.eq.s32.totalorder %s24, 0
      %p51 = por %p49, %p50
      %s53 = sadd.s32 %s52, 1
      %p56 = scmp.eq.s32.totalorder %s18, 1
      %p57 = scmp.ne.s32.totalorder %s52, %s54
      %p58 = scmp.eq.s32.totalorder %s18, 0
      %p59 = por %p57, %p58
      %p60 = scmp.ne.s32.totalorder %s52, %s54
      %p61 = scmp.eq.s32.totalorder %s23, 1
      %p62 = por %p60, %p61
      %p63 = scmp.ne.s32.totalorder %s54, %s55
      %p64 = scmp.eq.s32.totalorder %s23, 0
      %p65 = por %p63, %p64
      %p66 = scmp.ne.s32.totalorder %s54, %s55
      %p67 = scmp.eq.s32.totalorder %s24, 1
      %p68 = por %p66, %p67
      %p70 = scmp.ne.s32.totalorder %s55, %s69
      %p71 = scmp.eq.s32.totalorder %s24, 0
      %p72 = por %p70, %p71
      %s74 = sadd.s32 %s73, 1
      %p77 = scmp.eq.s32.totalorder %s18, 1
      %p78 = scmp.ne.s32.totalorder %s73, %s75
      %p79 = scmp.eq.s32.totalorder %s18, 0
      %p80 = por %p78, %p79
      %p81 = scmp.ne.s32.totalorder %s73, %s75
      %p82 = scmp.eq.s32.totalorder %s23, 1
      %p83 = por %p81, %p82
      %p84 = scmp.ne.s32.totalorder %s75, %s76
      %p85 = scmp.eq.s32.totalorder %s23, 0
      %p86 = por %p84, %p85
      %p87 = scmp.ne.s32.totalorder %s75, %s76
      %p88 = scmp.eq.s32.totalorder %s24, 1
      %p89 = por %p87, %p88
      %p91 = scmp.ne.s32.totalorder %s76, %s90
      %p92 = scmp.eq.s32.totalorder %s24, 0
      %p93 = por %p91, %p92
      %s95 = sadd.s32 %s94, 1
      %p98 = scmp.eq.s32.totalorder %s18, 1
      %p99 = scmp.ne.s32.totalorder %s94, %s96
      %p100 = scmp.eq.s32.totalorder %s18, 0
      %p101 = por %p99, %p100
      %p102 = scmp.ne.s32.totalorder %s94, %s96
      %p103 = scmp.eq.s32.totalorder %s23, 1
      %p104 = por %p102, %p103
      %p105 = scmp.ne.s32.totalorder %s96, %s97
      %p106 = scmp.eq.s32.totalorder %s23, 0
      %p107 = por %p105, %p106
      %p108 = scmp.ne.s32.totalorder %s96, %s97
      %p109 = scmp.eq.s32.totalorder %s24, 1
      %p110 = por %p108, %p109
      %p112 = scmp.ne.s32.totalorder %s97, %s111
      %p113 = scmp.eq.s32.totalorder %s24, 0
      %p114 = por %p112, %p113
      %s116 = sadd.s32 %s115, 1
      %p119 = scmp.eq.s32.totalorder %s18, 1
      %p120 = scmp.ne.s32.totalorder %s115, %s117
      %p121 = scmp.eq.s32.totalorder %s18, 0
      %p122 = por %p120, %p121
      %p123 = scmp.ne.s32.totalorder %s115, %s117
      %p124 = scmp.eq.s32.totalorder %s23, 1
      %p125 = por %p123, %p124
      %p126 = scmp.ne.s32.totalorder %s117, %s118
      %p127 = scmp.eq.s32.totalorder %s23, 0
      %p128 = por %p126, %p127
      %p129 = scmp.ne.s32.totalorder %s117, %s118
      %p130 = scmp.eq.s32.totalorder %s24, 1
      %p131 = por %p129, %p130
      %p133 = scmp.ne.s32.totalorder %s118, %s132
      %p134 = scmp.eq.s32.totalorder %s24, 0
      %p135 = por %p133, %p134
      %s137 = sadd.s32 %s136, 1
      %p140 = scmp.eq.s32.totalorder %s18, 1
      %p141 = scmp.ne.s32.totalorder %s136, %s138
      %p142 = scmp.eq.s32.totalorder %s18, 0
      %p143 = por %p141, %p142
      %p144 = scmp.ne.s32.totalorder %s136, %s138
      %p145 = scmp.eq.s32.totalorder %s23, 1
      %p146 = por %p144, %p145
      %p147 = scmp.ne.s32.totalorder %s138, %s139
      %p148 = scmp.eq.s32.totalorder %s23, 0
      %p149 = por %p147, %p148
      %p150 = scmp.ne.s32.totalorder %s138, %s139
      %p151 = scmp.eq.s32.totalorder %s24, 1
      %p152 = por %p150, %p151
      %p154 = scmp.ne.s32.totalorder %s139, %s153
      %p155 = scmp.eq.s32.totalorder %s24, 0
      %p156 = por %p154, %p155
      %s157 = ssub.s32 %s18, %s25
      %p158 = scmp.eq.s32.totalorder %s157, 0
      %s160 = sadd.s32 %s159, 1
      %s161 = scalar_select %p158, %s159, %s160
      %p164 = pneg %p158
      %p165 = scmp.eq.s32.totalorder %s18, 1
      %p166 = por %p164, %p165
      %p167 = scmp.ne.s32.totalorder %s159, %s162
      %p168 = scmp.eq.s32.totalorder %s18, 0
      %p169 = por %p167, %p168
      %p170 = scmp.ne.s32.totalorder %s159, %s162
      %p171 = scmp.eq.s32.totalorder %s23, 1
      %p172 = por %p170, %p171
      %p173 = scmp.ne.s32.totalorder %s162, %s163
      %p174 = scmp.eq.s32.totalorder %s23, 0
      %p175 = por %p173, %p174
      %p176 = scmp.ne.s32.totalorder %s162, %s163
      %p177 = scmp.eq.s32.totalorder %s24, 1
      %p178 = por %p176, %p177
      %p180 = scmp.ne.s32.totalorder %s163, %s179
      %p181 = scmp.eq.s32.totalorder %s24, 0
      %p182 = por %p180, %p181
      %s184 = sadd.s32 %s183, 1
      %p187 = scmp.eq.s32.totalorder %s18, 1
      %p188 = scmp.ne.s32.totalorder %s183, %s185
      %p189 = scmp.eq.s32.totalorder %s18, 0
      %p190 = por %p188, %p189
      %p191 = scmp.ne.s32.totalorder %s183, %s185
      %p192 = scmp.eq.s32.totalorder %s23, 1
      %p193 = por %p191, %p192
      %p194 = scmp.ne.s32.totalorder %s185, %s186
      %p195 = scmp.eq.s32.totalorder %s23, 0
      %p196 = por %p194, %p195
      %p197 = scmp.ne.s32.totalorder %s185, %s186
      %p198 = scmp.eq.s32.totalorder %s24, 1
      %p199 = por %p197, %p198
      %p201 = scmp.ne.s32.totalorder %s186, %s200
      %p202 = scmp.eq.s32.totalorder %s24, 0
      %p203 = por %p201, %p202
      %p204 = scmp.le.s32.totalorder 1, %s18
      %p205 = scmp.lt.s32.totalorder %s18, 3
      %p206 = pnand %p204, %p205
      %p207 = pneg %p206
      // Predicated region
      $region9: #{rnn_forward_sequence.1} parent=5 // pred_check
        _
      $region10: #{rnn_forward_sequence.1} parent=5 // pred_check_branch
        %209 = sbr.rel (%p206) target = $region12
      $region11: #{rnn_forward_sequence.1} parent=5 // pred_region
        %s210 = ssub.s32 %s18, 1
        // Predicated region
        $region13: #{rnn_forward_sequence.1} parent=11 // pred_check
          %p211 = pneg %p65
        $region14: #{rnn_forward_sequence.1} parent=11 // pred_check_branch
          %213 = sbr.rel (%p211) target = $region16
        $region15: #{rnn_forward_sequence.1} parent=11 // pred_region
          _
        $region16: #{rnn_forward_sequence.1} parent=11 // pred_fallthru
          _
        // Predicated region
        $region17: #{rnn_forward_sequence.1} parent=11 // pred_check
          %p214 = pneg %p86
        $region18: #{rnn_forward_sequence.1} parent=11 // pred_check_branch
          %216 = sbr.rel (%p214) target = $region20
        $region19: #{rnn_forward_sequence.1} parent=11 // pred_region
          _
        $region20: #{rnn_forward_sequence.1} parent=11 // pred_fallthru
          _
        // Predicated region
        $region21: #{rnn_forward_sequence.1} parent=11 // pred_check
          %p217 = pneg %p107
        $region22: #{rnn_forward_sequence.1} parent=11 // pred_check_branch
          %219 = sbr.rel (%p217) target = $region24
        $region23: #{rnn_forward_sequence.1} parent=11 // pred_region
          _
        $region24: #{rnn_forward_sequence.1} parent=11 // pred_fallthru
          _
        // Predicated region
        $region25: #{rnn_forward_sequence.1} parent=11 // pred_check
          %p220 = pneg %p128
        $region26: #{rnn_forward_sequence.1} parent=11 // pred_check_branch
          %222 = sbr.rel (%p220) target = $region28
        $region27: #{rnn_forward_sequence.1} parent=11 // pred_region
          _
        $region28: #{rnn_forward_sequence.1} parent=11 // pred_fallthru
          _
        // Predicated region
        $region29: #{rnn_forward_sequence.1} parent=11 // pred_check
          %p223 = pneg %p149
        $region30: #{rnn_forward_sequence.1} parent=11 // pred_check_branch
          %225 = sbr.rel (%p223) target = $region32
        $region31: #{rnn_forward_sequence.1} parent=11 // pred_region
          _
        $region32: #{rnn_forward_sequence.1} parent=11 // pred_fallthru
          _
      $region12: #{rnn_forward_sequence.1} parent=5 // pred_fallthru
        _
      %p226 = scmp.lt.s32.totalorder %s18, 2
      // Predicated region
      $region33: #{rnn_forward_sequence.1} parent=5 // pred_check
        %p227 = pneg %p226
      $region34: #{rnn_forward_sequence.1} parent=5 // pred_check_branch
        %229 = sbr.rel (%p227) target = $region36
      $region35: #{rnn_forward_sequence.1} parent=5 // pred_region
        // Predicated region
        $region37: #{rnn_forward_sequence.1} parent=35 // pred_check
          %p230 = pneg %p38
        $region38: #{rnn_forward_sequence.1} parent=35 // pred_check_branch
          %232 = sbr.rel (%p230) target = $region40
        $region39: #{rnn_forward_sequence.1} parent=35 // pred_region
          %s233 = smul.u32 2, %s18
          %p234 = scmp.lt.s32.totalorder %s233, 3
          %s235 = scalar_select %p234, %s233, 3
          %s236 = smul.addr %s235, 8
          %s237 = scalar_lea.vmem %s0, %s236
          %s238 = smul.u32 2, %s18
        $region40: #{rnn_forward_sequence.1} parent=35 // pred_fallthru
          _
      $region36: #{rnn_forward_sequence.1} parent=5 // pred_fallthru
        _
      %p239 = scmp.le.s32.totalorder 1, %s18
      %p240 = scmp.lt.s32.totalorder %s18, 3
      %p241 = pnand %p239, %p240
      %p242 = pneg %p241
      // Predicated region
      $region41: #{rnn_forward_sequence.1} parent=5 // pred_check
        _
      $region42: #{rnn_forward_sequence.1} parent=5 // pred_check_branch
        %244 = sbr.rel (%p241) target = $region44
      $region43: #{rnn_forward_sequence.1} parent=5 // pred_region
        %s245 = ssub.s32 %s18, 1
        %s246 = smul.u32 2, %s23
        %p247 = scmp.lt.s32.totalorder %s246, 3
        %s248 = scalar_select %p247, %s246, 3
        %s249 = smul.addr %s248, 8
        %s250 = scalar_lea.vmem %s0, %s249
        %p251 = pneg %p44
        %p252 = pneg %p41
        %p253 = pneg %p65
        %p254 = pneg %p62
        %p255 = pneg %p86
        %p256 = pneg %p83
        %p257 = pneg %p107
        %p258 = pneg %p104
        %p259 = pneg %p128
        %p260 = pneg %p125
        %p261 = pneg %p149
        %p262 = pneg %p146
        %p263 = pneg %p175
        %p264 = pneg %p172
        %s265 = sand.u32 %s162, 1
        %s266 = scalar_lea.sflag [#allocation5], %s265
        %s267 = sand.u32 %s162, 1
        %s268 = smul.addr %s267, 16
        %s269 = scalar_lea.vmem [#allocation4], %s268
        %p270 = pneg %p196
        %p271 = pneg %p193
        %s272 = smul.u32 2, %s23
        %p273 = scmp.lt.s32.totalorder %s272, 3
        %s274 = scalar_select %p273, %s272, 3
        %s275 = smul.addr %s274, 8
        %s276 = scalar_lea.vmem %s0, %s275
        %s277 = smul.u32 2, %s23
        %s278 = smul.u32 2, %s23
        %p279 = scmp.eq.s32.totalorder %s23, 0
        // Predicated region
        $region45: #{rnn_forward_sequence.1} parent=43 // pred_check
          %p280 = pneg %p279
        $region46: #{rnn_forward_sequence.1} parent=43 // pred_check_branch
          %282 = sbr.rel (%p280) target = $region48
        $region47: #{rnn_forward_sequence.1} parent=43 // pred_region
          %v283 = vld [vmem:[%s5] sm:$0x1]
          %vm284 = vcmask 253952
          %285 = vst.msk [vmem:[#allocation6] sm:$0x1] %vm284, %v283
        $region48: #{rnn_forward_sequence.1} parent=43 // pred_fallthru
          _
        %v286 = vld [vmem:[%s2] sm:$0xff]
        %v287 = vld [vmem:[%s2 + $0x8] sm:$0xff]
        %v288 = vld [vmem:[%s2 + $0x10] sm:$0xff]
        %v289 = vld [vmem:[%s2 + $0x18] sm:$0xff]
        %v290 = vld [vmem:[%s1 + $0x1] sm:$0x1]
        %v291 = vld [vmem:[%s1] sm:$0x1]
        %s292 = scalar_select %p279, 1, 0
        %v293 = vstv %s292
        %vm294 = vcmp.eq.s32.totalorder %v293, 1
        %v295 = vsel %vm294, %v291, %v290
        %v296 = vld [vmem:[#allocation6] sm:$0x1]
        %vm297 = vcmask 261120
        %v299 = vsel %vm297, %v296, 0
        %301 = vmatprep.subr.mxu0 0.0
        %302 = vmatpush1.msra.mxu0 0.0
        %303 = vmatprep.subr.mxu0 0.0
        %304 = vmatpush1.msra.mxu0 0.0
        %305 = vmatprep.subr.mxu0 0.0
        %306 = vmatpush1.msra.mxu0 0.0
        %307 = vmatprep.subr.mxu0 0.0
        %308 = vmatpush1.msra.mxu0 0.0
        %309 = vmatprep.subr.mxu0 0.0
        %310 = vmatpush1.msra.mxu0 0.0
        %311 = vmatprep.subr.mxu0 0.0
        %312 = vmatpush1.msra.mxu0 0.0
        %313 = vmatprep.subr.mxu0 0.0
        %314 = vmatpush1.msra.mxu0 0.0
        %315 = vmatprep.subr.mxu0 0.0
        %316 = vmatpush1.msra.mxu0 0.0
        %317 = vmatprep.subr.mxu0 0.0
        %318 = vmatpush1.msra.mxu0 0.0
        %319 = vmatprep.subr.mxu0 0.0
        %320 = vmatpush1.msra.mxu0 0.0
        %321 = vmatprep.subr.mxu0 0.0
        %322 = vmatpush1.msra.mxu0 0.0
        %323 = vmatprep.subr.mxu0 0.0
        %324 = vmatpush1.msra.mxu0 0.0
        %325 = vmatprep.subr.mxu0 0.0
        %326 = vmatpush1.msra.mxu0 %v289
        %327 = vmatprep.subr.mxu0 0.0
        %328 = vmatpush1.msra.mxu0 %v288
        %329 = vmatprep.subr.mxu0 0.0
        %330 = vmatpush1.msra.mxu0 %v287
        %331 = vmatprep.subr.mxu0 0.0
        %332 = vmatpush1.msra.mxu0 %v286
        %333 = vmatprep.subr.mxu0 0.0
        %334 = vmatpush2.msra.mxu0 0.0
        %335 = vmatprep.subr.mxu0 0.0
        %336 = vmatpush2.msra.mxu0 0.0
        %337 = vmatprep.subr.mxu0 0.0
        %338 = vmatpush2.msra.mxu0 0.0
        %339 = vmatprep.subr.mxu0 0.0
        %340 = vmatpush2.msra.mxu0 0.0
        %341 = vmatprep.subr.mxu0 0.0
        %342 = vmatpush2.msra.mxu0 0.0
        %343 = vmatprep.subr.mxu0 0.0
        %344 = vmatpush2.msra.mxu0 0.0
        %345 = vmatprep.subr.mxu0 0.0
        %346 = vmatpush2.msra.mxu0 0.0
        %347 = vmatprep.subr.mxu0 0.0
        %348 = vmatpush2.msra.mxu0 0.0
        %349 = vmatprep.subr.mxu0 0.0
        %350 = vmatpush2.msra.mxu0 0.0
        %351 = vmatprep.subr.mxu0 0.0
        %352 = vmatpush2.msra.mxu0 0.0
        %353 = vmatprep.subr.mxu0 0.0
        %354 = vmatpush2.msra.mxu0 0.0
        %355 = vmatprep.subr.mxu0 0.0
        %356 = vmatpush2.msra.mxu0 0.0
        %357 = vmatprep.subr.mxu0 0.0
        %358 = vmatpush2.msra.mxu0 0.0
        %359 = vmatprep.subr.mxu0 0.0
        %360 = vmatpush2.msra.mxu0 0.0
        %361 = vmatprep.subr.mxu0 0.0
        %362 = vmatpush2.msra.mxu0 0.0
        %363 = vmatprep.subr.mxu0 0.0
        %364 = vmatpush2.msra.mxu0 0.0
        %365 = vmatprep.mubr.f32.mxu0 0.0
        %366 = vmatmul.mubr.f32.gmra.mxu0 %v299
        %v367 = vpop.f32.mrf.mxu0
        %v368 = vadd.f32 %v295, %v367
        %v369 = vpop.f32.mrf.mxu0
        %370 = vdwg.mxu0
        %vm371 = vcmask 253952
        %372 = vst.msk [vmem:[#allocation2] sm:$0x1] %vm371, %v296
        %373 = vst.msk [vmem:[#allocation3] sm:$0x1] %vm371, %v368
        %v375 = vsel %vm297, %v368, 0
        %377 = vmatprep.subr.mxu0 0.0
        %378 = vmatpush1.msra.mxu0 0.0
        %379 = vmatprep.subr.mxu0 0.0
        %380 = vmatpush1.msra.mxu0 0.0
        %381 = vmatprep.subr.mxu0 0.0
        %382 = vmatpush1.msra.mxu0 0.0
        %383 = vmatprep.subr.mxu0 0.0
        %384 = vmatpush1.msra.mxu0 0.0
        %385 = vmatprep.subr.mxu0 0.0
        %386 = vmatpush1.msra.mxu0 0.0
        %387 = vmatprep.subr.mxu0 0.0
        %388 = vmatpush1.msra.mxu0 0.0
        %389 = vmatprep.subr.mxu0 0.0
        %390 = vmatpush1.msra.mxu0 0.0
        %391 = vmatprep.subr.mxu0 0.0
        %392 = vmatpush1.msra.mxu0 0.0
        %393 = vmatprep.subr.mxu0 0.0
        %394 = vmatpush1.msra.mxu0 0.0
        %395 = vmatprep.subr.mxu0 0.0
        %396 = vmatpush1.msra.mxu0 0.0
        %397 = vmatprep.subr.mxu0 0.0
        %398 = vmatpush1.msra.mxu0 0.0
        %399 = vmatprep.subr.mxu0 0.0
        %400 = vmatpush1.msra.mxu0 0.0
        %401 = vmatprep.subr.mxu0 0.0
        %402 = vmatpush1.msra.mxu0 %v289
        %403 = vmatprep.subr.mxu0 0.0
        %404 = vmatpush1.msra.mxu0 %v288
        %405 = vmatprep.subr.mxu0 0.0
        %406 = vmatpush1.msra.mxu0 %v287
        %407 = vmatprep.subr.mxu0 0.0
        %408 = vmatpush1.msra.mxu0 %v286
        %409 = vmatprep.subr.mxu0 0.0
        %410 = vmatpush2.msra.mxu0 0.0
        %411 = vmatprep.subr.mxu0 0.0
        %412 = vmatpush2.msra.mxu0 0.0
        %413 = vmatprep.subr.mxu0 0.0
        %414 = vmatpush2.msra.mxu0 0.0
        %415 = vmatprep.subr.mxu0 0.0
        %416 = vmatpush2.msra.mxu0 0.0
        %417 = vmatprep.subr.mxu0 0.0
        %418 = vmatpush2.msra.mxu0 0.0
        %419 = vmatprep.subr.mxu0 0.0
        %420 = vmatpush2.msra.mxu0 0.0
        %421 = vmatprep.subr.mxu0 0.0
        %422 = vmatpush2.msra.mxu0 0.0
        %423 = vmatprep.subr.mxu0 0.0
        %424 = vmatpush2.msra.mxu0 0.0
        %425 = vmatprep.subr.mxu0 0.0
        %426 = vmatpush2.msra.mxu0 0.0
        %427 = vmatprep.subr.mxu0 0.0
        %428 = vmatpush2.msra.mxu0 0.0
        %429 = vmatprep.subr.mxu0 0.0
        %430 = vmatpush2.msra.mxu0 0.0
        %431 = vmatprep.subr.mxu0 0.0
        %432 = vmatpush2.msra.mxu0 0.0
        %433 = vmatprep.subr.mxu0 0.0
        %434 = vmatpush2.msra.mxu0 0.0
        %435 = vmatprep.subr.mxu0 0.0
        %436 = vmatpush2.msra.mxu0 0.0
        %437 = vmatprep.subr.mxu0 0.0
        %438 = vmatpush2.msra.mxu0 0.0
        %439 = vmatprep.subr.mxu0 0.0
        %440 = vmatpush2.msra.mxu0 0.0
        %441 = vmatprep.mubr.f32.mxu0 0.0
        %442 = vmatmul.mubr.f32.gmra.mxu0 %v375
        %v443 = vpop.f32.mrf.mxu0
        %v444 = vadd.f32 %v290, %v443
        %v445 = vpop.f32.mrf.mxu0
        %446 = vdwg.mxu0
        %447 = vst.msk [vmem:[#allocation2 + $0x1] sm:$0x1] %vm371, %v368
        %448 = vst.msk [vmem:[#allocation3 + $0x1] sm:$0x1] %vm371, %v444
        %v450 = vsel %vm297, %v444, 0
        %452 = vmatprep.subr.mxu0 0.0
        %453 = vmatpush1.msra.mxu0 0.0
        %454 = vmatprep.subr.mxu0 0.0
        %455 = vmatpush1.msra.mxu0 0.0
        %456 = vmatprep.subr.mxu0 0.0
        %457 = vmatpush1.msra.mxu0 0.0
        %458 = vmatprep.subr.mxu0 0.0
        %459 = vmatpush1.msra.mxu0 0.0
        %460 = vmatprep.subr.mxu0 0.0
        %461 = vmatpush1.msra.mxu0 0.0
        %462 = vmatprep.subr.mxu0 0.0
        %463 = vmatpush1.msra.mxu0 0.0
        %464 = vmatprep.subr.mxu0 0.0
        %465 = vmatpush1.msra.mxu0 0.0
        %466 = vmatprep.subr.mxu0 0.0
        %467 = vmatpush1.msra.mxu0 0.0
        %468 = vmatprep.subr.mxu0 0.0
        %469 = vmatpush1.msra.mxu0 0.0
        %470 = vmatprep.subr.mxu0 0.0
        %471 = vmatpush1.msra.mxu0 0.0
        %472 = vmatprep.subr.mxu0 0.0
        %473 = vmatpush1.msra.mxu0 0.0
        %474 = vmatprep.subr.mxu0 0.0
        %475 = vmatpush1.msra.mxu0 0.0
        %476 = vmatprep.subr.mxu0 0.0
        %477 = vmatpush1.msra.mxu0 %v289
        %478 = vmatprep.subr.mxu0 0.0
        %479 = vmatpush1.msra.mxu0 %v288
        %480 = vmatprep.subr.mxu0 0.0
        %481 = vmatpush1.msra.mxu0 %v287
        %482 = vmatprep.subr.mxu0 0.0
        %483 = vmatpush1.msra.mxu0 %v286
        %484 = vmatprep.subr.mxu0 0.0
        %485 = vmatpush2.msra.mxu0 0.0
        %486 = vmatprep.subr.mxu0 0.0
        %487 = vmatpush2.msra.mxu0 0.0
        %488 = vmatprep.subr.mxu0 0.0
        %489 = vmatpush2.msra.mxu0 0.0
        %490 = vmatprep.subr.mxu0 0.0
        %491 = vmatpush2.msra.mxu0 0.0
        %492 = vmatprep.subr.mxu0 0.0
        %493 = vmatpush2.msra.mxu0 0.0
        %494 = vmatprep.subr.mxu0 0.0
        %495 = vmatpush2.msra.mxu0 0.0
        %496 = vmatprep.subr.mxu0 0.0
        %497 = vmatpush2.msra.mxu0 0.0
        %498 = vmatprep.subr.mxu0 0.0
        %499 = vmatpush2.msra.mxu0 0.0
        %500 = vmatprep.subr.mxu0 0.0
        %501 = vmatpush2.msra.mxu0 0.0
        %502 = vmatprep.subr.mxu0 0.0
        %503 = vmatpush2.msra.mxu0 0.0
        %504 = vmatprep.subr.mxu0 0.0
        %505 = vmatpush2.msra.mxu0 0.0
        %506 = vmatprep.subr.mxu0 0.0
        %507 = vmatpush2.msra.mxu0 0.0
        %508 = vmatprep.subr.mxu0 0.0
        %509 = vmatpush2.msra.mxu0 0.0
        %510 = vmatprep.subr.mxu0 0.0
        %511 = vmatpush2.msra.mxu0 0.0
        %512 = vmatprep.subr.mxu0 0.0
        %513 = vmatpush2.msra.mxu0 0.0
        %514 = vmatprep.subr.mxu0 0.0
        %515 = vmatpush2.msra.mxu0 0.0
        %516 = vmatprep.mubr.f32.mxu0 0.0
        %517 = vmatmul.mubr.f32.gmra.mxu0 %v450
        %v518 = vpop.f32.mrf.mxu0
        %v519 = vadd.f32 %v290, %v518
        %v520 = vpop.f32.mrf.mxu0
        %521 = vdwg.mxu0
        %522 = vst.msk [vmem:[#allocation2 + $0x2] sm:$0x1] %vm371, %v444
        %523 = vst.msk [vmem:[#allocation3 + $0x2] sm:$0x1] %vm371, %v519
        %v525 = vsel %vm297, %v519, 0
        %527 = vmatprep.subr.mxu0 0.0
        %528 = vmatpush1.msra.mxu0 0.0
        %529 = vmatprep.subr.mxu0 0.0
        %530 = vmatpush1.msra.mxu0 0.0
        %531 = vmatprep.subr.mxu0 0.0
        %532 = vmatpush1.msra.mxu0 0.0
        %533 = vmatprep.subr.mxu0 0.0
        %534 = vmatpush1.msra.mxu0 0.0
        %535 = vmatprep.subr.mxu0 0.0
        %536 = vmatpush1.msra.mxu0 0.0
        %537 = vmatprep.subr.mxu0 0.0
        %538 = vmatpush1.msra.mxu0 0.0
        %539 = vmatprep.subr.mxu0 0.0
        %540 = vmatpush1.msra.mxu0 0.0
        %541 = vmatprep.subr.mxu0 0.0
        %542 = vmatpush1.msra.mxu0 0.0
        %543 = vmatprep.subr.mxu0 0.0
        %544 = vmatpush1.msra.mxu0 0.0
        %545 = vmatprep.subr.mxu0 0.0
        %546 = vmatpush1.msra.mxu0 0.0
        %547 = vmatprep.subr.mxu0 0.0
        %548 = vmatpush1.msra.mxu0 0.0
        %549 = vmatprep.subr.mxu0 0.0
        %550 = vmatpush1.msra.mxu0 0.0
        %551 = vmatprep.subr.mxu0 0.0
        %552 = vmatpush1.msra.mxu0 %v289
        %553 = vmatprep.subr.mxu0 0.0
        %554 = vmatpush1.msra.mxu0 %v288
        %555 = vmatprep.subr.mxu0 0.0
        %556 = vmatpush1.msra.mxu0 %v287
        %557 = vmatprep.subr.mxu0 0.0
        %558 = vmatpush1.msra.mxu0 %v286
        %559 = vmatprep.subr.mxu0 0.0
        %560 = vmatpush2.msra.mxu0 0.0
        %561 = vmatprep.subr.mxu0 0.0
        %562 = vmatpush2.msra.mxu0 0.0
        %563 = vmatprep.subr.mxu0 0.0
        %564 = vmatpush2.msra.mxu0 0.0
        %565 = vmatprep.subr.mxu0 0.0
        %566 = vmatpush2.msra.mxu0 0.0
        %567 = vmatprep.subr.mxu0 0.0
        %568 = vmatpush2.msra.mxu0 0.0
        %569 = vmatprep.subr.mxu0 0.0
        %570 = vmatpush2.msra.mxu0 0.0
        %571 = vmatprep.subr.mxu0 0.0
        %572 = vmatpush2.msra.mxu0 0.0
        %573 = vmatprep.subr.mxu0 0.0
        %574 = vmatpush2.msra.mxu0 0.0
        %575 = vmatprep.subr.mxu0 0.0
        %576 = vmatpush2.msra.mxu0 0.0
        %577 = vmatprep.subr.mxu0 0.0
        %578 = vmatpush2.msra.mxu0 0.0
        %579 = vmatprep.subr.mxu0 0.0
        %580 = vmatpush2.msra.mxu0 0.0
        %581 = vmatprep.subr.mxu0 0.0
        %582 = vmatpush2.msra.mxu0 0.0
        %583 = vmatprep.subr.mxu0 0.0
        %584 = vmatpush2.msra.mxu0 0.0
        %585 = vmatprep.subr.mxu0 0.0
        %586 = vmatpush2.msra.mxu0 0.0
        %587 = vmatprep.subr.mxu0 0.0
        %588 = vmatpush2.msra.mxu0 0.0
        %589 = vmatprep.subr.mxu0 0.0
        %590 = vmatpush2.msra.mxu0 0.0
        %591 = vmatprep.mubr.f32.mxu0 0.0
        %592 = vmatmul.mubr.f32.gmra.mxu0 %v525
        %v593 = vpop.f32.mrf.mxu0
        %v594 = vadd.f32 %v290, %v593
        %v595 = vpop.f32.mrf.mxu0
        %596 = vdwg.mxu0
        %597 = vst.msk [vmem:[#allocation2 + $0x3] sm:$0x1] %vm371, %v519
        %598 = vst.msk [vmem:[#allocation3 + $0x3] sm:$0x1] %vm371, %v594
        %v600 = vsel %vm297, %v594, 0
        %602 = vmatprep.subr.mxu0 0.0
        %603 = vmatpush1.msra.mxu0 0.0
        %604 = vmatprep.subr.mxu0 0.0
        %605 = vmatpush1.msra.mxu0 0.0
        %606 = vmatprep.subr.mxu0 0.0
        %607 = vmatpush1.msra.mxu0 0.0
        %608 = vmatprep.subr.mxu0 0.0
        %609 = vmatpush1.msra.mxu0 0.0
        %610 = vmatprep.subr.mxu0 0.0
        %611 = vmatpush1.msra.mxu0 0.0
        %612 = vmatprep.subr.mxu0 0.0
        %613 = vmatpush1.msra.mxu0 0.0
        %614 = vmatprep.subr.mxu0 0.0
        %615 = vmatpush1.msra.mxu0 0.0
        %616 = vmatprep.subr.mxu0 0.0
        %617 = vmatpush1.msra.mxu0 0.0
        %618 = vmatprep.subr.mxu0 0.0
        %619 = vmatpush1.msra.mxu0 0.0
        %620 = vmatprep.subr.mxu0 0.0
        %621 = vmatpush1.msra.mxu0 0.0
        %622 = vmatprep.subr.mxu0 0.0
        %623 = vmatpush1.msra.mxu0 0.0
        %624 = vmatprep.subr.mxu0 0.0
        %625 = vmatpush1.msra.mxu0 0.0
        %626 = vmatprep.subr.mxu0 0.0
        %627 = vmatpush1.msra.mxu0 %v289
        %628 = vmatprep.subr.mxu0 0.0
        %629 = vmatpush1.msra.mxu0 %v288
        %630 = vmatprep.subr.mxu0 0.0
        %631 = vmatpush1.msra.mxu0 %v287
        %632 = vmatprep.subr.mxu0 0.0
        %633 = vmatpush1.msra.mxu0 %v286
        %634 = vmatprep.subr.mxu0 0.0
        %635 = vmatpush2.msra.mxu0 0.0
        %636 = vmatprep.subr.mxu0 0.0
        %637 = vmatpush2.msra.mxu0 0.0
        %638 = vmatprep.subr.mxu0 0.0
        %639 = vmatpush2.msra.mxu0 0.0
        %640 = vmatprep.subr.mxu0 0.0
        %641 = vmatpush2.msra.mxu0 0.0
        %642 = vmatprep.subr.mxu0 0.0
        %643 = vmatpush2.msra.mxu0 0.0
        %644 = vmatprep.subr.mxu0 0.0
        %645 = vmatpush2.msra.mxu0 0.0
        %646 = vmatprep.subr.mxu0 0.0
        %647 = vmatpush2.msra.mxu0 0.0
        %648 = vmatprep.subr.mxu0 0.0
        %649 = vmatpush2.msra.mxu0 0.0
        %650 = vmatprep.subr.mxu0 0.0
        %651 = vmatpush2.msra.mxu0 0.0
        %652 = vmatprep.subr.mxu0 0.0
        %653 = vmatpush2.msra.mxu0 0.0
        %654 = vmatprep.subr.mxu0 0.0
        %655 = vmatpush2.msra.mxu0 0.0
        %656 = vmatprep.subr.mxu0 0.0
        %657 = vmatpush2.msra.mxu0 0.0
        %658 = vmatprep.subr.mxu0 0.0
        %659 = vmatpush2.msra.mxu0 0.0
        %660 = vmatprep.subr.mxu0 0.0
        %661 = vmatpush2.msra.mxu0 0.0
        %662 = vmatprep.subr.mxu0 0.0
        %663 = vmatpush2.msra.mxu0 0.0
        %664 = vmatprep.subr.mxu0 0.0
        %665 = vmatpush2.msra.mxu0 0.0
        %666 = vmatprep.mubr.f32.mxu0 0.0
        %667 = vmatmul.mubr.f32.gmra.mxu0 %v600
        %v668 = vpop.f32.mrf.mxu0
        %v669 = vadd.f32 %v290, %v668
        %v670 = vpop.f32.mrf.mxu0
        %671 = vdwg.mxu0
        %672 = vst.msk [vmem:[#allocation2 + $0x4] sm:$0x1] %vm371, %v594
        %673 = vst.msk [vmem:[#allocation3 + $0x4] sm:$0x1] %vm371, %v669
        %v675 = vsel %vm297, %v669, 0
        %677 = vmatprep.subr.mxu0 0.0
        %678 = vmatpush1.msra.mxu0 0.0
        %679 = vmatprep.subr.mxu0 0.0
        %680 = vmatpush1.msra.mxu0 0.0
        %681 = vmatprep.subr.mxu0 0.0
        %682 = vmatpush1.msra.mxu0 0.0
        %683 = vmatprep.subr.mxu0 0.0
        %684 = vmatpush1.msra.mxu0 0.0
        %685 = vmatprep.subr.mxu0 0.0
        %686 = vmatpush1.msra.mxu0 0.0
        %687 = vmatprep.subr.mxu0 0.0
        %688 = vmatpush1.msra.mxu0 0.0
        %689 = vmatprep.subr.mxu0 0.0
        %690 = vmatpush1.msra.mxu0 0.0
        %691 = vmatprep.subr.mxu0 0.0
        %692 = vmatpush1.msra.mxu0 0.0
        %693 = vmatprep.subr.mxu0 0.0
        %694 = vmatpush1.msra.mxu0 0.0
        %695 = vmatprep.subr.mxu0 0.0
        %696 = vmatpush1.msra.mxu0 0.0
        %697 = vmatprep.subr.mxu0 0.0
        %698 = vmatpush1.msra.mxu0 0.0
        %699 = vmatprep.subr.mxu0 0.0
        %700 = vmatpush1.msra.mxu0 0.0
        %701 = vmatprep.subr.mxu0 0.0
        %702 = vmatpush1.msra.mxu0 %v289
        %703 = vmatprep.subr.mxu0 0.0
        %704 = vmatpush1.msra.mxu0 %v288
        %705 = vmatprep.subr.mxu0 0.0
        %706 = vmatpush1.msra.mxu0 %v287
        %707 = vmatprep.subr.mxu0 0.0
        %708 = vmatpush1.msra.mxu0 %v286
        %709 = vmatprep.subr.mxu0 0.0
        %710 = vmatpush2.msra.mxu0 0.0
        %711 = vmatprep.subr.mxu0 0.0
        %712 = vmatpush2.msra.mxu0 0.0
        %713 = vmatprep.subr.mxu0 0.0
        %714 = vmatpush2.msra.mxu0 0.0
        %715 = vmatprep.subr.mxu0 0.0
        %716 = vmatpush2.msra.mxu0 0.0
        %717 = vmatprep.subr.mxu0 0.0
        %718 = vmatpush2.msra.mxu0 0.0
        %719 = vmatprep.subr.mxu0 0.0
        %720 = vmatpush2.msra.mxu0 0.0
        %721 = vmatprep.subr.mxu0 0.0
        %722 = vmatpush2.msra.mxu0 0.0
        %723 = vmatprep.subr.mxu0 0.0
        %724 = vmatpush2.msra.mxu0 0.0
        %725 = vmatprep.subr.mxu0 0.0
        %726 = vmatpush2.msra.mxu0 0.0
        %727 = vmatprep.subr.mxu0 0.0
        %728 = vmatpush2.msra.mxu0 0.0
        %729 = vmatprep.subr.mxu0 0.0
        %730 = vmatpush2.msra.mxu0 0.0
        %731 = vmatprep.subr.mxu0 0.0
        %732 = vmatpush2.msra.mxu0 0.0
        %733 = vmatprep.subr.mxu0 0.0
        %734 = vmatpush2.msra.mxu0 0.0
        %735 = vmatprep.subr.mxu0 0.0
        %736 = vmatpush2.msra.mxu0 0.0
        %737 = vmatprep.subr.mxu0 0.0
        %738 = vmatpush2.msra.mxu0 0.0
        %739 = vmatprep.subr.mxu0 0.0
        %740 = vmatpush2.msra.mxu0 0.0
        %741 = vmatprep.mubr.f32.mxu0 0.0
        %742 = vmatmul.mubr.f32.gmra.mxu0 %v675
        %v743 = vpop.f32.mrf.mxu0
        %v744 = vadd.f32 %v290, %v743
        %v745 = vpop.f32.mrf.mxu0
        %746 = vdwg.mxu0
        %747 = vst.msk [vmem:[#allocation2 + $0x5] sm:$0x1] %vm371, %v669
        %748 = vst.msk [vmem:[#allocation3 + $0x5] sm:$0x1] %vm371, %v744
        %v750 = vsel %vm297, %v744, 0
        %752 = vmatprep.subr.mxu0 0.0
        %753 = vmatpush1.msra.mxu0 0.0
        %754 = vmatprep.subr.mxu0 0.0
        %755 = vmatpush1.msra.mxu0 0.0
        %756 = vmatprep.subr.mxu0 0.0
        %757 = vmatpush1.msra.mxu0 0.0
        %758 = vmatprep.subr.mxu0 0.0
        %759 = vmatpush1.msra.mxu0 0.0
        %760 = vmatprep.subr.mxu0 0.0
        %761 = vmatpush1.msra.mxu0 0.0
        %762 = vmatprep.subr.mxu0 0.0
        %763 = vmatpush1.msra.mxu0 0.0
        %764 = vmatprep.subr.mxu0 0.0
        %765 = vmatpush1.msra.mxu0 0.0
        %766 = vmatprep.subr.mxu0 0.0
        %767 = vmatpush1.msra.mxu0 0.0
        %768 = vmatprep.subr.mxu0 0.0
        %769 = vmatpush1.msra.mxu0 0.0
        %770 = vmatprep.subr.mxu0 0.0
        %771 = vmatpush1.msra.mxu0 0.0
        %772 = vmatprep.subr.mxu0 0.0
        %773 = vmatpush1.msra.mxu0 0.0
        %774 = vmatprep.subr.mxu0 0.0
        %775 = vmatpush1.msra.mxu0 0.0
        %776 = vmatprep.subr.mxu0 0.0
        %777 = vmatpush1.msra.mxu0 %v289
        %778 = vmatprep.subr.mxu0 0.0
        %779 = vmatpush1.msra.mxu0 %v288
        %780 = vmatprep.subr.mxu0 0.0
        %781 = vmatpush1.msra.mxu0 %v287
        %782 = vmatprep.subr.mxu0 0.0
        %783 = vmatpush1.msra.mxu0 %v286
        %784 = vmatprep.subr.mxu0 0.0
        %785 = vmatpush2.msra.mxu0 0.0
        %786 = vmatprep.subr.mxu0 0.0
        %787 = vmatpush2.msra.mxu0 0.0
        %788 = vmatprep.subr.mxu0 0.0
        %789 = vmatpush2.msra.mxu0 0.0
        %790 = vmatprep.subr.mxu0 0.0
        %791 = vmatpush2.msra.mxu0 0.0
        %792 = vmatprep.subr.mxu0 0.0
        %793 = vmatpush2.msra.mxu0 0.0
        %794 = vmatprep.subr.mxu0 0.0
        %795 = vmatpush2.msra.mxu0 0.0
        %796 = vmatprep.subr.mxu0 0.0
        %797 = vmatpush2.msra.mxu0 0.0
        %798 = vmatprep.subr.mxu0 0.0
        %799 = vmatpush2.msra.mxu0 0.0
        %800 = vmatprep.subr.mxu0 0.0
        %801 = vmatpush2.msra.mxu0 0.0
        %802 = vmatprep.subr.mxu0 0.0
        %803 = vmatpush2.msra.mxu0 0.0
        %804 = vmatprep.subr.mxu0 0.0
        %805 = vmatpush2.msra.mxu0 0.0
        %806 = vmatprep.subr.mxu0 0.0
        %807 = vmatpush2.msra.mxu0 0.0
        %808 = vmatprep.subr.mxu0 0.0
        %809 = vmatpush2.msra.mxu0 0.0
        %810 = vmatprep.subr.mxu0 0.0
        %811 = vmatpush2.msra.mxu0 0.0
        %812 = vmatprep.subr.mxu0 0.0
        %813 = vmatpush2.msra.mxu0 0.0
        %814 = vmatprep.subr.mxu0 0.0
        %815 = vmatpush2.msra.mxu0 0.0
        %816 = vmatprep.mubr.f32.mxu0 0.0
        %817 = vmatmul.mubr.f32.gmra.mxu0 %v750
        %v818 = vpop.f32.mrf.mxu0
        %v819 = vadd.f32 %v290, %v818
        %v820 = vpop.f32.mrf.mxu0
        %821 = vdwg.mxu0
        %822 = vst.msk [vmem:[#allocation2 + $0x6] sm:$0x1] %vm371, %v744
        %823 = vst.msk [vmem:[#allocation3 + $0x6] sm:$0x1] %vm371, %v819
        %v825 = vsel %vm297, %v819, 0
        %827 = vmatprep.subr.mxu0 0.0
        %828 = vmatpush1.msra.mxu0 0.0
        %829 = vmatprep.subr.mxu0 0.0
        %830 = vmatpush1.msra.mxu0 0.0
        %831 = vmatprep.subr.mxu0 0.0
        %832 = vmatpush1.msra.mxu0 0.0
        %833 = vmatprep.subr.mxu0 0.0
        %834 = vmatpush1.msra.mxu0 0.0
        %835 = vmatprep.subr.mxu0 0.0
        %836 = vmatpush1.msra.mxu0 0.0
        %837 = vmatprep.subr.mxu0 0.0
        %838 = vmatpush1.msra.mxu0 0.0
        %839 = vmatprep.subr.mxu0 0.0
        %840 = vmatpush1.msra.mxu0 0.0
        %841 = vmatprep.subr.mxu0 0.0
        %842 = vmatpush1.msra.mxu0 0.0
        %843 = vmatprep.subr.mxu0 0.0
        %844 = vmatpush1.msra.mxu0 0.0
        %845 = vmatprep.subr.mxu0 0.0
        %846 = vmatpush1.msra.mxu0 0.0
        %847 = vmatprep.subr.mxu0 0.0
        %848 = vmatpush1.msra.mxu0 0.0
        %849 = vmatprep.subr.mxu0 0.0
        %850 = vmatpush1.msra.mxu0 0.0
        %851 = vmatprep.subr.mxu0 0.0
        %852 = vmatpush1.msra.mxu0 %v289
        %853 = vmatprep.subr.mxu0 0.0
        %854 = vmatpush1.msra.mxu0 %v288
        %855 = vmatprep.subr.mxu0 0.0
        %856 = vmatpush1.msra.mxu0 %v287
        %857 = vmatprep.subr.mxu0 0.0
        %858 = vmatpush1.msra.mxu0 %v286
        %859 = vmatprep.subr.mxu0 0.0
        %860 = vmatpush2.msra.mxu0 0.0
        %861 = vmatprep.subr.mxu0 0.0
        %862 = vmatpush2.msra.mxu0 0.0
        %863 = vmatprep.subr.mxu0 0.0
        %864 = vmatpush2.msra.mxu0 0.0
        %865 = vmatprep.subr.mxu0 0.0
        %866 = vmatpush2.msra.mxu0 0.0
        %867 = vmatprep.subr.mxu0 0.0
        %868 = vmatpush2.msra.mxu0 0.0
        %869 = vmatprep.subr.mxu0 0.0
        %870 = vmatpush2.msra.mxu0 0.0
        %871 = vmatprep.subr.mxu0 0.0
        %872 = vmatpush2.msra.mxu0 0.0
        %873 = vmatprep.subr.mxu0 0.0
        %874 = vmatpush2.msra.mxu0 0.0
        %875 = vmatprep.subr.mxu0 0.0
        %876 = vmatpush2.msra.mxu0 0.0
        %877 = vmatprep.subr.mxu0 0.0
        %878 = vmatpush2.msra.mxu0 0.0
        %879 = vmatprep.subr.mxu0 0.0
        %880 = vmatpush2.msra.mxu0 0.0
        %881 = vmatprep.subr.mxu0 0.0
        %882 = vmatpush2.msra.mxu0 0.0
        %883 = vmatprep.subr.mxu0 0.0
        %884 = vmatpush2.msra.mxu0 0.0
        %885 = vmatprep.subr.mxu0 0.0
        %886 = vmatpush2.msra.mxu0 0.0
        %887 = vmatprep.subr.mxu0 0.0
        %888 = vmatpush2.msra.mxu0 0.0
        %889 = vmatprep.subr.mxu0 0.0
        %890 = vmatpush2.msra.mxu0 0.0
        %891 = vmatprep.mubr.f32.mxu0 0.0
        %892 = vmatmul.mubr.f32.gmra.mxu0 %v825
        %v893 = vpop.f32.mrf.mxu0
        %v894 = vadd.f32 %v290, %v893
        %v895 = vpop.f32.mrf.mxu0
        %896 = vdwg.mxu0
        %897 = vst.msk [vmem:[#allocation2 + $0x7] sm:$0x1] %vm371, %v819
        %898 = vst.msk [vmem:[#allocation3 + $0x7] sm:$0x1] %vm371, %v894
        %v900 = vsel %vm297, %v894, 0
        %902 = vmatprep.subr.mxu0 0.0
        %903 = vmatpush1.msra.mxu0 0.0
        %904 = vmatprep.subr.mxu0 0.0
        %905 = vmatpush1.msra.mxu0 0.0
        %906 = vmatprep.subr.mxu0 0.0
        %907 = vmatpush1.msra.mxu0 0.0
        %908 = vmatprep.subr.mxu0 0.0
        %909 = vmatpush1.msra.mxu0 0.0
        %910 = vmatprep.subr.mxu0 0.0
        %911 = vmatpush1.msra.mxu0 0.0
        %912 = vmatprep.subr.mxu0 0.0
        %913 = vmatpush1.msra.mxu0 0.0
        %914 = vmatprep.subr.mxu0 0.0
        %915 = vmatpush1.msra.mxu0 0.0
        %916 = vmatprep.subr.mxu0 0.0
        %917 = vmatpush1.msra.mxu0 0.0
        %918 = vmatprep.subr.mxu0 0.0
        %919 = vmatpush1.msra.mxu0 0.0
        %920 = vmatprep.subr.mxu0 0.0
        %921 = vmatpush1.msra.mxu0 0.0
        %922 = vmatprep.subr.mxu0 0.0
        %923 = vmatpush1.msra.mxu0 0.0
        %924 = vmatprep.subr.mxu0 0.0
        %925 = vmatpush1.msra.mxu0 0.0
        %926 = vmatprep.subr.mxu0 0.0
        %927 = vmatpush1.msra.mxu0 %v289
        %928 = vmatprep.subr.mxu0 0.0
        %929 = vmatpush1.msra.mxu0 %v288
        %930 = vmatprep.subr.mxu0 0.0
        %931 = vmatpush1.msra.mxu0 %v287
        %932 = vmatprep.subr.mxu0 0.0
        %933 = vmatpush1.msra.mxu0 %v286
        %934 = vmatprep.subr.mxu0 0.0
        %935 = vmatpush2.msra.mxu0 0.0
        %936 = vmatprep.subr.mxu0 0.0
        %937 = vmatpush2.msra.mxu0 0.0
        %938 = vmatprep.subr.mxu0 0.0
        %939 = vmatpush2.msra.mxu0 0.0
        %940 = vmatprep.subr.mxu0 0.0
        %941 = vmatpush2.msra.mxu0 0.0
        %942 = vmatprep.subr.mxu0 0.0
        %943 = vmatpush2.msra.mxu0 0.0
        %944 = vmatprep.subr.mxu0 0.0
        %945 = vmatpush2.msra.mxu0 0.0
        %946 = vmatprep.subr.mxu0 0.0
        %947 = vmatpush2.msra.mxu0 0.0
        %948 = vmatprep.subr.mxu0 0.0
        %949 = vmatpush2.msra.mxu0 0.0
        %950 = vmatprep.subr.mxu0 0.0
        %951 = vmatpush2.msra.mxu0 0.0
        %952 = vmatprep.subr.mxu0 0.0
        %953 = vmatpush2.msra.mxu0 0.0
        %954 = vmatprep.subr.mxu0 0.0
        %955 = vmatpush2.msra.mxu0 0.0
        %956 = vmatprep.subr.mxu0 0.0
        %957 = vmatpush2.msra.mxu0 0.0
        %958 = vmatprep.subr.mxu0 0.0
        %959 = vmatpush2.msra.mxu0 0.0
        %960 = vmatprep.subr.mxu0 0.0
        %961 = vmatpush2.msra.mxu0 0.0
        %962 = vmatprep.subr.mxu0 0.0
        %963 = vmatpush2.msra.mxu0 0.0
        %964 = vmatprep.subr.mxu0 0.0
        %965 = vmatpush2.msra.mxu0 0.0
        %966 = vmatprep.mubr.f32.mxu0 0.0
        %967 = vmatmul.mubr.f32.gmra.mxu0 %v900
        %v968 = vpop.f32.mrf.mxu0
        %v969 = vadd.f32 %v290, %v968
        %v970 = vpop.f32.mrf.mxu0
        %971 = vdwg.mxu0
        %972 = vst.msk [vmem:[#allocation2 + $0x8] sm:$0x1] %vm371, %v894
        %973 = vst.msk [vmem:[#allocation3 + $0x8] sm:$0x1] %vm371, %v969
        %v975 = vsel %vm297, %v969, 0
        %977 = vmatprep.subr.mxu0 0.0
        %978 = vmatpush1.msra.mxu0 0.0
        %979 = vmatprep.subr.mxu0 0.0
        %980 = vmatpush1.msra.mxu0 0.0
        %981 = vmatprep.subr.mxu0 0.0
        %982 = vmatpush1.msra.mxu0 0.0
        %983 = vmatprep.subr.mxu0 0.0
        %984 = vmatpush1.msra.mxu0 0.0
        %985 = vmatprep.subr.mxu0 0.0
        %986 = vmatpush1.msra.mxu0 0.0
        %987 = vmatprep.subr.mxu0 0.0
        %988 = vmatpush1.msra.mxu0 0.0
        %989 = vmatprep.subr.mxu0 0.0
        %990 = vmatpush1.msra.mxu0 0.0
        %991 = vmatprep.subr.mxu0 0.0
        %992 = vmatpush1.msra.mxu0 0.0
        %993 = vmatprep.subr.mxu0 0.0
        %994 = vmatpush1.msra.mxu0 0.0
        %995 = vmatprep.subr.mxu0 0.0
        %996 = vmatpush1.msra.mxu0 0.0
        %997 = vmatprep.subr.mxu0 0.0
        %998 = vmatpush1.msra.mxu0 0.0
        %999 = vmatprep.subr.mxu0 0.0
        %1000 = vmatpush1.msra.mxu0 0.0
        %1001 = vmatprep.subr.mxu0 0.0
        %1002 = vmatpush1.msra.mxu0 %v289
        %1003 = vmatprep.subr.mxu0 0.0
        %1004 = vmatpush1.msra.mxu0 %v288
        %1005 = vmatprep.subr.mxu0 0.0
        %1006 = vmatpush1.msra.mxu0 %v287
        %1007 = vmatprep.subr.mxu0 0.0
        %1008 = vmatpush1.msra.mxu0 %v286
        %1009 = vmatprep.subr.mxu0 0.0
        %1010 = vmatpush2.msra.mxu0 0.0
        %1011 = vmatprep.subr.mxu0 0.0
        %1012 = vmatpush2.msra.mxu0 0.0
        %1013 = vmatprep.subr.mxu0 0.0
        %1014 = vmatpush2.msra.mxu0 0.0
        %1015 = vmatprep.subr.mxu0 0.0
        %1016 = vmatpush2.msra.mxu0 0.0
        %1017 = vmatprep.subr.mxu0 0.0
        %1018 = vmatpush2.msra.mxu0 0.0
        %1019 = vmatprep.subr.mxu0 0.0
        %1020 = vmatpush2.msra.mxu0 0.0
        %1021 = vmatprep.subr.mxu0 0.0
        %1022 = vmatpush2.msra.mxu0 0.0
        %1023 = vmatprep.subr.mxu0 0.0
        %1024 = vmatpush2.msra.mxu0 0.0
        %1025 = vmatprep.subr.mxu0 0.0
        %1026 = vmatpush2.msra.mxu0 0.0
        %1027 = vmatprep.subr.mxu0 0.0
        %1028 = vmatpush2.msra.mxu0 0.0
        %1029 = vmatprep.subr.mxu0 0.0
        %1030 = vmatpush2.msra.mxu0 0.0
        %1031 = vmatprep.subr.mxu0 0.0
        %1032 = vmatpush2.msra.mxu0 0.0
        %1033 = vmatprep.subr.mxu0 0.0
        %1034 = vmatpush2.msra.mxu0 0.0
        %1035 = vmatprep.subr.mxu0 0.0
        %1036 = vmatpush2.msra.mxu0 0.0
        %1037 = vmatprep.subr.mxu0 0.0
        %1038 = vmatpush2.msra.mxu0 0.0
        %1039 = vmatprep.subr.mxu0 0.0
        %1040 = vmatpush2.msra.mxu0 0.0
        %1041 = vmatprep.mubr.f32.mxu0 0.0
        %1042 = vmatmul.mubr.f32.gmra.mxu0 %v975
        %v1043 = vpop.f32.mrf.mxu0
        %v1044 = vadd.f32 %v290, %v1043
        %v1045 = vpop.f32.mrf.mxu0
        %1046 = vdwg.mxu0
        %1047 = vst.msk [vmem:[#allocation2 + $0x9] sm:$0x1] %vm371, %v969
        %1048 = vst.msk [vmem:[#allocation3 + $0x9] sm:$0x1] %vm371, %v1044
        %v1050 = vsel %vm297, %v1044, 0
        %1052 = vmatprep.subr.mxu0 0.0
        %1053 = vmatpush1.msra.mxu0 0.0
        %1054 = vmatprep.subr.mxu0 0.0
        %1055 = vmatpush1.msra.mxu0 0.0
        %1056 = vmatprep.subr.mxu0 0.0
        %1057 = vmatpush1.msra.mxu0 0.0
        %1058 = vmatprep.subr.mxu0 0.0
        %1059 = vmatpush1.msra.mxu0 0.0
        %1060 = vmatprep.subr.mxu0 0.0
        %1061 = vmatpush1.msra.mxu0 0.0
        %1062 = vmatprep.subr.mxu0 0.0
        %1063 = vmatpush1.msra.mxu0 0.0
        %1064 = vmatprep.subr.mxu0 0.0
        %1065 = vmatpush1.msra.mxu0 0.0
        %1066 = vmatprep.subr.mxu0 0.0
        %1067 = vmatpush1.msra.mxu0 0.0
        %1068 = vmatprep.subr.mxu0 0.0
        %1069 = vmatpush1.msra.mxu0 0.0
        %1070 = vmatprep.subr.mxu0 0.0
        %1071 = vmatpush1.msra.mxu0 0.0
        %1072 = vmatprep.subr.mxu0 0.0
        %1073 = vmatpush1.msra.mxu0 0.0
        %1074 = vmatprep.subr.mxu0 0.0
        %1075 = vmatpush1.msra.mxu0 0.0
        %1076 = vmatprep.subr.mxu0 0.0
        %1077 = vmatpush1.msra.mxu0 %v289
        %1078 = vmatprep.subr.mxu0 0.0
        %1079 = vmatpush1.msra.mxu0 %v288
        %1080 = vmatprep.subr.mxu0 0.0
        %1081 = vmatpush1.msra.mxu0 %v287
        %1082 = vmatprep.subr.mxu0 0.0
        %1083 = vmatpush1.msra.mxu0 %v286
        %1084 = vmatprep.subr.mxu0 0.0
        %1085 = vmatpush2.msra.mxu0 0.0
        %1086 = vmatprep.subr.mxu0 0.0
        %1087 = vmatpush2.msra.mxu0 0.0
        %1088 = vmatprep.subr.mxu0 0.0
        %1089 = vmatpush2.msra.mxu0 0.0
        %1090 = vmatprep.subr.mxu0 0.0
        %1091 = vmatpush2.msra.mxu0 0.0
        %1092 = vmatprep.subr.mxu0 0.0
        %1093 = vmatpush2.msra.mxu0 0.0
        %1094 = vmatprep.subr.mxu0 0.0
        %1095 = vmatpush2.msra.mxu0 0.0
        %1096 = vmatprep.subr.mxu0 0.0
        %1097 = vmatpush2.msra.mxu0 0.0
        %1098 = vmatprep.subr.mxu0 0.0
        %1099 = vmatpush2.msra.mxu0 0.0
        %1100 = vmatprep.subr.mxu0 0.0
        %1101 = vmatpush2.msra.mxu0 0.0
        %1102 = vmatprep.subr.mxu0 0.0
        %1103 = vmatpush2.msra.mxu0 0.0
        %1104 = vmatprep.subr.mxu0 0.0
        %1105 = vmatpush2.msra.mxu0 0.0
        %1106 = vmatprep.subr.mxu0 0.0
        %1107 = vmatpush2.msra.mxu0 0.0
        %1108 = vmatprep.subr.mxu0 0.0
        %1109 = vmatpush2.msra.mxu0 0.0
        %1110 = vmatprep.subr.mxu0 0.0
        %1111 = vmatpush2.msra.mxu0 0.0
        %1112 = vmatprep.subr.mxu0 0.0
        %1113 = vmatpush2.msra.mxu0 0.0
        %1114 = vmatprep.subr.mxu0 0.0
        %1115 = vmatpush2.msra.mxu0 0.0
        %1116 = vmatprep.mubr.f32.mxu0 0.0
        %1117 = vmatmul.mubr.f32.gmra.mxu0 %v1050
        %v1118 = vpop.f32.mrf.mxu0
        %v1119 = vadd.f32 %v290, %v1118
        %v1120 = vpop.f32.mrf.mxu0
        %1121 = vdwg.mxu0
        %1122 = vst.msk [vmem:[#allocation2 + $0xa] sm:$0x1] %vm371, %v1044
        %1123 = vst.msk [vmem:[#allocation3 + $0xa] sm:$0x1] %vm371, %v1119
        %v1125 = vsel %vm297, %v1119, 0
        %1127 = vmatprep.subr.mxu0 0.0
        %1128 = vmatpush1.msra.mxu0 0.0
        %1129 = vmatprep.subr.mxu0 0.0
        %1130 = vmatpush1.msra.mxu0 0.0
        %1131 = vmatprep.subr.mxu0 0.0
        %1132 = vmatpush1.msra.mxu0 0.0
        %1133 = vmatprep.subr.mxu0 0.0
        %1134 = vmatpush1.msra.mxu0 0.0
        %1135 = vmatprep.subr.mxu0 0.0
        %1136 = vmatpush1.msra.mxu0 0.0
        %1137 = vmatprep.subr.mxu0 0.0
        %1138 = vmatpush1.msra.mxu0 0.0
        %1139 = vmatprep.subr.mxu0 0.0
        %1140 = vmatpush1.msra.mxu0 0.0
        %1141 = vmatprep.subr.mxu0 0.0
        %1142 = vmatpush1.msra.mxu0 0.0
        %1143 = vmatprep.subr.mxu0 0.0
        %1144 = vmatpush1.msra.mxu0 0.0
        %1145 = vmatprep.subr.mxu0 0.0
        %1146 = vmatpush1.msra.mxu0 0.0
        %1147 = vmatprep.subr.mxu0 0.0
        %1148 = vmatpush1.msra.mxu0 0.0
        %1149 = vmatprep.subr.mxu0 0.0
        %1150 = vmatpush1.msra.mxu0 0.0
        %1151 = vmatprep.subr.mxu0 0.0
        %1152 = vmatpush1.msra.mxu0 %v289
        %1153 = vmatprep.subr.mxu0 0.0
        %1154 = vmatpush1.msra.mxu0 %v288
        %1155 = vmatprep.subr.mxu0 0.0
        %1156 = vmatpush1.msra.mxu0 %v287
        %1157 = vmatprep.subr.mxu0 0.0
        %1158 = vmatpush1.msra.mxu0 %v286
        %1159 = vmatprep.subr.mxu0 0.0
        %1160 = vmatpush2.msra.mxu0 0.0
        %1161 = vmatprep.subr.mxu0 0.0
        %1162 = vmatpush2.msra.mxu0 0.0
        %1163 = vmatprep.subr.mxu0 0.0
        %1164 = vmatpush2.msra.mxu0 0.0
        %1165 = vmatprep.subr.mxu0 0.0
        %1166 = vmatpush2.msra.mxu0 0.0
        %1167 = vmatprep.subr.mxu0 0.0
        %1168 = vmatpush2.msra.mxu0 0.0
        %1169 = vmatprep.subr.mxu0 0.0
        %1170 = vmatpush2.msra.mxu0 0.0
        %1171 = vmatprep.subr.mxu0 0.0
        %1172 = vmatpush2.msra.mxu0 0.0
        %1173 = vmatprep.subr.mxu0 0.0
        %1174 = vmatpush2.msra.mxu0 0.0
        %1175 = vmatprep.subr.mxu0 0.0
        %1176 = vmatpush2.msra.mxu0 0.0
        %1177 = vmatprep.subr.mxu0 0.0
        %1178 = vmatpush2.msra.mxu0 0.0
        %1179 = vmatprep.subr.mxu0 0.0
        %1180 = vmatpush2.msra.mxu0 0.0
        %1181 = vmatprep.subr.mxu0 0.0
        %1182 = vmatpush2.msra.mxu0 0.0
        %1183 = vmatprep.subr.mxu0 0.0
        %1184 = vmatpush2.msra.mxu0 0.0
        %1185 = vmatprep.subr.mxu0 0.0
        %1186 = vmatpush2.msra.mxu0 0.0
        %1187 = vmatprep.subr.mxu0 0.0
        %1188 = vmatpush2.msra.mxu0 0.0
        %1189 = vmatprep.subr.mxu0 0.0
        %1190 = vmatpush2.msra.mxu0 0.0
        %1191 = vmatprep.mubr.f32.mxu0 0.0
        %1192 = vmatmul.mubr.f32.gmra.mxu0 %v1125
        %v1193 = vpop.f32.mrf.mxu0
        %v1194 = vadd.f32 %v290, %v1193
        %v1195 = vpop.f32.mrf.mxu0
        %1196 = vdwg.mxu0
        %1197 = vst.msk [vmem:[#allocation2 + $0xb] sm:$0x1] %vm371, %v1119
        %1198 = vst.msk [vmem:[#allocation3 + $0xb] sm:$0x1] %vm371, %v1194
        %v1200 = vsel %vm297, %v1194, 0
        %1202 = vmatprep.subr.mxu0 0.0
        %1203 = vmatpush1.msra.mxu0 0.0
        %1204 = vmatprep.subr.mxu0 0.0
        %1205 = vmatpush1.msra.mxu0 0.0
        %1206 = vmatprep.subr.mxu0 0.0
        %1207 = vmatpush1.msra.mxu0 0.0
        %1208 = vmatprep.subr.mxu0 0.0
        %1209 = vmatpush1.msra.mxu0 0.0
        %1210 = vmatprep.subr.mxu0 0.0
        %1211 = vmatpush1.msra.mxu0 0.0
        %1212 = vmatprep.subr.mxu0 0.0
        %1213 = vmatpush1.msra.mxu0 0.0
        %1214 = vmatprep.subr.mxu0 0.0
        %1215 = vmatpush1.msra.mxu0 0.0
        %1216 = vmatprep.subr.mxu0 0.0
        %1217 = vmatpush1.msra.mxu0 0.0
        %1218 = vmatprep.subr.mxu0 0.0
        %1219 = vmatpush1.msra.mxu0 0.0
        %1220 = vmatprep.subr.mxu0 0.0
        %1221 = vmatpush1.msra.mxu0 0.0
        %1222 = vmatprep.subr.mxu0 0.0
        %1223 = vmatpush1.msra.mxu0 0.0
        %1224 = vmatprep.subr.mxu0 0.0
        %1225 = vmatpush1.msra.mxu0 0.0
        %1226 = vmatprep.subr.mxu0 0.0
        %1227 = vmatpush1.msra.mxu0 %v289
        %1228 = vmatprep.subr.mxu0 0.0
        %1229 = vmatpush1.msra.mxu0 %v288
        %1230 = vmatprep.subr.mxu0 0.0
        %1231 = vmatpush1.msra.mxu0 %v287
        %1232 = vmatprep.subr.mxu0 0.0
        %1233 = vmatpush1.msra.mxu0 %v286
        %1234 = vmatprep.subr.mxu0 0.0
        %1235 = vmatpush2.msra.mxu0 0.0
        %1236 = vmatprep.subr.mxu0 0.0
        %1237 = vmatpush2.msra.mxu0 0.0
        %1238 = vmatprep.subr.mxu0 0.0
        %1239 = vmatpush2.msra.mxu0 0.0
        %1240 = vmatprep.subr.mxu0 0.0
        %1241 = vmatpush2.msra.mxu0 0.0
        %1242 = vmatprep.subr.mxu0 0.0
        %1243 = vmatpush2.msra.mxu0 0.0
        %1244 = vmatprep.subr.mxu0 0.0
        %1245 = vmatpush2.msra.mxu0 0.0
        %1246 = vmatprep.subr.mxu0 0.0
        %1247 = vmatpush2.msra.mxu0 0.0
        %1248 = vmatprep.subr.mxu0 0.0
        %1249 = vmatpush2.msra.mxu0 0.0
        %1250 = vmatprep.subr.mxu0 0.0
        %1251 = vmatpush2.msra.mxu0 0.0
        %1252 = vmatprep.subr.mxu0 0.0
        %1253 = vmatpush2.msra.mxu0 0.0
        %1254 = vmatprep.subr.mxu0 0.0
        %1255 = vmatpush2.msra.mxu0 0.0
        %1256 = vmatprep.subr.mxu0 0.0
        %1257 = vmatpush2.msra.mxu0 0.0
        %1258 = vmatprep.subr.mxu0 0.0
        %1259 = vmatpush2.msra.mxu0 0.0
        %1260 = vmatprep.subr.mxu0 0.0
        %1261 = vmatpush2.msra.mxu0 0.0
        %1262 = vmatprep.subr.mxu0 0.0
        %1263 = vmatpush2.msra.mxu0 0.0
        %1264 = vmatprep.subr.mxu0 0.0
        %1265 = vmatpush2.msra.mxu0 0.0
        %1266 = vmatprep.mubr.f32.mxu0 0.0
        %1267 = vmatmul.mubr.f32.gmra.mxu0 %v1200
        %v1268 = vpop.f32.mrf.mxu0
        %v1269 = vadd.f32 %v290, %v1268
        %v1270 = vpop.f32.mrf.mxu0
        %1271 = vdwg.mxu0
        %1272 = vst.msk [vmem:[#allocation2 + $0xc] sm:$0x1] %vm371, %v1194
        %1273 = vst.msk [vmem:[#allocation3 + $0xc] sm:$0x1] %vm371, %v1269
        %v1275 = vsel %vm297, %v1269, 0
        %1277 = vmatprep.subr.mxu0 0.0
        %1278 = vmatpush1.msra.mxu0 0.0
        %1279 = vmatprep.subr.mxu0 0.0
        %1280 = vmatpush1.msra.mxu0 0.0
        %1281 = vmatprep.subr.mxu0 0.0
        %1282 = vmatpush1.msra.mxu0 0.0
        %1283 = vmatprep.subr.mxu0 0.0
        %1284 = vmatpush1.msra.mxu0 0.0
        %1285 = vmatprep.subr.mxu0 0.0
        %1286 = vmatpush1.msra.mxu0 0.0
        %1287 = vmatprep.subr.mxu0 0.0
        %1288 = vmatpush1.msra.mxu0 0.0
        %1289 = vmatprep.subr.mxu0 0.0
        %1290 = vmatpush1.msra.mxu0 0.0
        %1291 = vmatprep.subr.mxu0 0.0
        %1292 = vmatpush1.msra.mxu0 0.0
        %1293 = vmatprep.subr.mxu0 0.0
        %1294 = vmatpush1.msra.mxu0 0.0
        %1295 = vmatprep.subr.mxu0 0.0
        %1296 = vmatpush1.msra.mxu0 0.0
        %1297 = vmatprep.subr.mxu0 0.0
        %1298 = vmatpush1.msra.mxu0 0.0
        %1299 = vmatprep.subr.mxu0 0.0
        %1300 = vmatpush1.msra.mxu0 0.0
        %1301 = vmatprep.subr.mxu0 0.0
        %1302 = vmatpush1.msra.mxu0 %v289
        %1303 = vmatprep.subr.mxu0 0.0
        %1304 = vmatpush1.msra.mxu0 %v288
        %1305 = vmatprep.subr.mxu0 0.0
        %1306 = vmatpush1.msra.mxu0 %v287
        %1307 = vmatprep.subr.mxu0 0.0
        %1308 = vmatpush1.msra.mxu0 %v286
        %1309 = vmatprep.subr.mxu0 0.0
        %1310 = vmatpush2.msra.mxu0 0.0
        %1311 = vmatprep.subr.mxu0 0.0
        %1312 = vmatpush2.msra.mxu0 0.0
        %1313 = vmatprep.subr.mxu0 0.0
        %1314 = vmatpush2.msra.mxu0 0.0
        %1315 = vmatprep.subr.mxu0 0.0
        %1316 = vmatpush2.msra.mxu0 0.0
        %1317 = vmatprep.subr.mxu0 0.0
        %1318 = vmatpush2.msra.mxu0 0.0
        %1319 = vmatprep.subr.mxu0 0.0
        %1320 = vmatpush2.msra.mxu0 0.0
        %1321 = vmatprep.subr.mxu0 0.0
        %1322 = vmatpush2.msra.mxu0 0.0
        %1323 = vmatprep.subr.mxu0 0.0
        %1324 = vmatpush2.msra.mxu0 0.0
        %1325 = vmatprep.subr.mxu0 0.0
        %1326 = vmatpush2.msra.mxu0 0.0
        %1327 = vmatprep.subr.mxu0 0.0
        %1328 = vmatpush2.msra.mxu0 0.0
        %1329 = vmatprep.subr.mxu0 0.0
        %1330 = vmatpush2.msra.mxu0 0.0
        %1331 = vmatprep.subr.mxu0 0.0
        %1332 = vmatpush2.msra.mxu0 0.0
        %1333 = vmatprep.subr.mxu0 0.0
        %1334 = vmatpush2.msra.mxu0 0.0
        %1335 = vmatprep.subr.mxu0 0.0
        %1336 = vmatpush2.msra.mxu0 0.0
        %1337 = vmatprep.subr.mxu0 0.0
        %1338 = vmatpush2.msra.mxu0 0.0
        %1339 = vmatprep.subr.mxu0 0.0
        %1340 = vmatpush2.msra.mxu0 0.0
        %1341 = vmatprep.mubr.f32.mxu0 0.0
        %1342 = vmatmul.mubr.f32.gmra.mxu0 %v1275
        %v1343 = vpop.f32.mrf.mxu0
        %v1344 = vadd.f32 %v290, %v1343
        %v1345 = vpop.f32.mrf.mxu0
        %1346 = vdwg.mxu0
        %1347 = vst.msk [vmem:[#allocation2 + $0xd] sm:$0x1] %vm371, %v1269
        %1348 = vst.msk [vmem:[#allocation3 + $0xd] sm:$0x1] %vm371, %v1344
        %v1350 = vsel %vm297, %v1344, 0
        %1352 = vmatprep.subr.mxu0 0.0
        %1353 = vmatpush1.msra.mxu0 0.0
        %1354 = vmatprep.subr.mxu0 0.0
        %1355 = vmatpush1.msra.mxu0 0.0
        %1356 = vmatprep.subr.mxu0 0.0
        %1357 = vmatpush1.msra.mxu0 0.0
        %1358 = vmatprep.subr.mxu0 0.0
        %1359 = vmatpush1.msra.mxu0 0.0
        %1360 = vmatprep.subr.mxu0 0.0
        %1361 = vmatpush1.msra.mxu0 0.0
        %1362 = vmatprep.subr.mxu0 0.0
        %1363 = vmatpush1.msra.mxu0 0.0
        %1364 = vmatprep.subr.mxu0 0.0
        %1365 = vmatpush1.msra.mxu0 0.0
        %1366 = vmatprep.subr.mxu0 0.0
        %1367 = vmatpush1.msra.mxu0 0.0
        %1368 = vmatprep.subr.mxu0 0.0
        %1369 = vmatpush1.msra.mxu0 0.0
        %1370 = vmatprep.subr.mxu0 0.0
        %1371 = vmatpush1.msra.mxu0 0.0
        %1372 = vmatprep.subr.mxu0 0.0
        %1373 = vmatpush1.msra.mxu0 0.0
        %1374 = vmatprep.subr.mxu0 0.0
        %1375 = vmatpush1.msra.mxu0 0.0
        %1376 = vmatprep.subr.mxu0 0.0
        %1377 = vmatpush1.msra.mxu0 %v289
        %1378 = vmatprep.subr.mxu0 0.0
        %1379 = vmatpush1.msra.mxu0 %v288
        %1380 = vmatprep.subr.mxu0 0.0
        %1381 = vmatpush1.msra.mxu0 %v287
        %1382 = vmatprep.subr.mxu0 0.0
        %1383 = vmatpush1.msra.mxu0 %v286
        %1384 = vmatprep.subr.mxu0 0.0
        %1385 = vmatpush2.msra.mxu0 0.0
        %1386 = vmatprep.subr.mxu0 0.0
        %1387 = vmatpush2.msra.mxu0 0.0
        %1388 = vmatprep.subr.mxu0 0.0
        %1389 = vmatpush2.msra.mxu0 0.0
        %1390 = vmatprep.subr.mxu0 0.0
        %1391 = vmatpush2.msra.mxu0 0.0
        %1392 = vmatprep.subr.mxu0 0.0
        %1393 = vmatpush2.msra.mxu0 0.0
        %1394 = vmatprep.subr.mxu0 0.0
        %1395 = vmatpush2.msra.mxu0 0.0
        %1396 = vmatprep.subr.mxu0 0.0
        %1397 = vmatpush2.msra.mxu0 0.0
        %1398 = vmatprep.subr.mxu0 0.0
        %1399 = vmatpush2.msra.mxu0 0.0
        %1400 = vmatprep.subr.mxu0 0.0
        %1401 = vmatpush2.msra.mxu0 0.0
        %1402 = vmatprep.subr.mxu0 0.0
        %1403 = vmatpush2.msra.mxu0 0.0
        %1404 = vmatprep.subr.mxu0 0.0
        %1405 = vmatpush2.msra.mxu0 0.0
        %1406 = vmatprep.subr.mxu0 0.0
        %1407 = vmatpush2.msra.mxu0 0.0
        %1408 = vmatprep.subr.mxu0 0.0
        %1409 = vmatpush2.msra.mxu0 0.0
        %1410 = vmatprep.subr.mxu0 0.0
        %1411 = vmatpush2.msra.mxu0 0.0
        %1412 = vmatprep.subr.mxu0 0.0
        %1413 = vmatpush2.msra.mxu0 0.0
        %1414 = vmatprep.subr.mxu0 0.0
        %1415 = vmatpush2.msra.mxu0 0.0
        %1416 = vmatprep.mubr.f32.mxu0 0.0
        %1417 = vmatmul.mubr.f32.gmra.mxu0 %v1350
        %v1418 = vpop.f32.mrf.mxu0
        %v1419 = vadd.f32 %v290, %v1418
        %v1420 = vpop.f32.mrf.mxu0
        %1421 = vdwg.mxu0
        %1422 = vst.msk [vmem:[#allocation2 + $0xe] sm:$0x1] %vm371, %v1344
        %1423 = vst.msk [vmem:[#allocation3 + $0xe] sm:$0x1] %vm371, %v1419
        %v1425 = vsel %vm297, %v1419, 0
        %1427 = vmatprep.subr.mxu0 0.0
        %1428 = vmatpush1.msra.mxu0 0.0
        %1429 = vmatprep.subr.mxu0 0.0
        %1430 = vmatpush1.msra.mxu0 0.0
        %1431 = vmatprep.subr.mxu0 0.0
        %1432 = vmatpush1.msra.mxu0 0.0
        %1433 = vmatprep.subr.mxu0 0.0
        %1434 = vmatpush1.msra.mxu0 0.0
        %1435 = vmatprep.subr.mxu0 0.0
        %1436 = vmatpush1.msra.mxu0 0.0
        %1437 = vmatprep.subr.mxu0 0.0
        %1438 = vmatpush1.msra.mxu0 0.0
        %1439 = vmatprep.subr.mxu0 0.0
        %1440 = vmatpush1.msra.mxu0 0.0
        %1441 = vmatprep.subr.mxu0 0.0
        %1442 = vmatpush1.msra.mxu0 0.0
        %1443 = vmatprep.subr.mxu0 0.0
        %1444 = vmatpush1.msra.mxu0 0.0
        %1445 = vmatprep.subr.mxu0 0.0
        %1446 = vmatpush1.msra.mxu0 0.0
        %1447 = vmatprep.subr.mxu0 0.0
        %1448 = vmatpush1.msra.mxu0 0.0
        %1449 = vmatprep.subr.mxu0 0.0
        %1450 = vmatpush1.msra.mxu0 0.0
        %1451 = vmatprep.subr.mxu0 0.0
        %1452 = vmatpush1.msra.mxu0 %v289
        %1453 = vmatprep.subr.mxu0 0.0
        %1454 = vmatpush1.msra.mxu0 %v288
        %1455 = vmatprep.subr.mxu0 0.0
        %1456 = vmatpush1.msra.mxu0 %v287
        %1457 = vmatprep.subr.mxu0 0.0
        %1458 = vmatpush1.msra.mxu0 %v286
        %1459 = vmatprep.subr.mxu0 0.0
        %1460 = vmatpush2.msra.mxu0 0.0
        %1461 = vmatprep.subr.mxu0 0.0
        %1462 = vmatpush2.msra.mxu0 0.0
        %1463 = vmatprep.subr.mxu0 0.0
        %1464 = vmatpush2.msra.mxu0 0.0
        %1465 = vmatprep.subr.mxu0 0.0
        %1466 = vmatpush2.msra.mxu0 0.0
        %1467 = vmatprep.subr.mxu0 0.0
        %1468 = vmatpush2.msra.mxu0 0.0
        %1469 = vmatprep.subr.mxu0 0.0
        %1470 = vmatpush2.msra.mxu0 0.0
        %1471 = vmatprep.subr.mxu0 0.0
        %1472 = vmatpush2.msra.mxu0 0.0
        %1473 = vmatprep.subr.mxu0 0.0
        %1474 = vmatpush2.msra.mxu0 0.0
        %1475 = vmatprep.subr.mxu0 0.0
        %1476 = vmatpush2.msra.mxu0 0.0
        %1477 = vmatprep.subr.mxu0 0.0
        %1478 = vmatpush2.msra.mxu0 0.0
        %1479 = vmatprep.subr.mxu0 0.0
        %1480 = vmatpush2.msra.mxu0 0.0
        %1481 = vmatprep.subr.mxu0 0.0
        %1482 = vmatpush2.msra.mxu0 0.0
        %1483 = vmatprep.subr.mxu0 0.0
        %1484 = vmatpush2.msra.mxu0 0.0
        %1485 = vmatprep.subr.mxu0 0.0
        %1486 = vmatpush2.msra.mxu0 0.0
        %1487 = vmatprep.subr.mxu0 0.0
        %1488 = vmatpush2.msra.mxu0 0.0
        %1489 = vmatprep.subr.mxu0 0.0
        %1490 = vmatpush2.msra.mxu0 0.0
        %1491 = vmatprep.mubr.f32.mxu0 0.0
        %1492 = vmatmul.mubr.f32.gmra.mxu0 %v1425
        %v1493 = vpop.f32.mrf.mxu0
        %v1494 = vadd.f32 %v290, %v1493
        %v1495 = vpop.f32.mrf.mxu0
        %1496 = vdwg.mxu0
        %1497 = vst.msk [vmem:[#allocation2 + $0xf] sm:$0x1] %vm371, %v1419
        %1498 = vst.msk [vmem:[#allocation3 + $0xf] sm:$0x1] %vm371, %v1494
        %1499 = vst.msk [vmem:[#allocation6] sm:$0x1] %vm371, %v1494
        %v1500 = vld [vmem:[#allocation3] sm:$0xff]
        %v1501 = vld [vmem:[#allocation3 + $0x8] sm:$0xff]
        %v1502 = vld [vmem:[%s3] sm:$0xff]
        %v1503 = vld [vmem:[%s3 + $0x8] sm:$0xff]
        %v1504 = vld [vmem:[%s3 + $0x10] sm:$0xff]
        %v1505 = vld [vmem:[%s3 + $0x18] sm:$0xff]
        %v1506 = vld [vmem:[#allocation2] sm:$0xff]
        %v1507 = vld [vmem:[#allocation2 + $0x8] sm:$0xff]
        %v1508 = vld [vmem:[%s4] sm:$0xff]
        %v1509 = vld [vmem:[%s4 + $0x8] sm:$0xff]
        %v1510 = vld [vmem:[%s4 + $0x10] sm:$0xff]
        %v1511 = vld [vmem:[%s4 + $0x18] sm:$0xff]
        %v1513 = vsel %vm297, %v1506, 0
        %v1516 = vsel %vm297, %v1507, 0
        %1518 = vmatprep.subr.mxu0 0.0
        %1519 = vmatpush1.msra.mxu0 0.0
        %1520 = vmatprep.subr.mxu0 0.0
        %1521 = vmatpush1.msra.mxu0 0.0
        %1522 = vmatprep.subr.mxu0 0.0
        %1523 = vmatpush1.msra.mxu0 0.0
        %1524 = vmatprep.subr.mxu0 0.0
        %1525 = vmatpush1.msra.mxu0 0.0
        %1526 = vmatprep.subr.mxu0 0.0
        %1527 = vmatpush1.msra.mxu0 0.0
        %1528 = vmatprep.subr.mxu0 0.0
        %1529 = vmatpush1.msra.mxu0 0.0
        %1530 = vmatprep.subr.mxu0 0.0
        %1531 = vmatpush1.msra.mxu0 0.0
        %1532 = vmatprep.subr.mxu0 0.0
        %1533 = vmatpush1.msra.mxu0 0.0
        %1534 = vmatprep.subr.mxu0 0.0
        %1535 = vmatpush1.msra.mxu0 0.0
        %1536 = vmatprep.subr.mxu0 0.0
        %1537 = vmatpush1.msra.mxu0 0.0
        %1538 = vmatprep.subr.mxu0 0.0
        %1539 = vmatpush1.msra.mxu0 0.0
        %1540 = vmatprep.subr.mxu0 0.0
        %1541 = vmatpush1.msra.mxu0 0.0
        %1542 = vmatprep.subr.mxu0 0.0
        %1543 = vmatpush1.msra.mxu0 %v1511
        %1544 = vmatprep.subr.mxu0 0.0
        %1545 = vmatpush1.msra.mxu0 %v1510
        %1546 = vmatprep.subr.mxu0 0.0
        %1547 = vmatpush1.msra.mxu0 %v1509
        %1548 = vmatprep.subr.mxu0 0.0
        %1549 = vmatpush1.msra.mxu0 %v1508
        %1550 = vmatprep.subr.mxu0 0.0
        %1551 = vmatpush2.msra.mxu0 0.0
        %1552 = vmatprep.subr.mxu0 0.0
        %1553 = vmatpush2.msra.mxu0 0.0
        %1554 = vmatprep.subr.mxu0 0.0
        %1555 = vmatpush2.msra.mxu0 0.0
        %1556 = vmatprep.subr.mxu0 0.0
        %1557 = vmatpush2.msra.mxu0 0.0
        %1558 = vmatprep.subr.mxu0 0.0
        %1559 = vmatpush2.msra.mxu0 0.0
        %1560 = vmatprep.subr.mxu0 0.0
        %1561 = vmatpush2.msra.mxu0 0.0
        %1562 = vmatprep.subr.mxu0 0.0
        %1563 = vmatpush2.msra.mxu0 0.0
        %1564 = vmatprep.subr.mxu0 0.0
        %1565 = vmatpush2.msra.mxu0 0.0
        %1566 = vmatprep.subr.mxu0 0.0
        %1567 = vmatpush2.msra.mxu0 0.0
        %1568 = vmatprep.subr.mxu0 0.0
        %1569 = vmatpush2.msra.mxu0 0.0
        %1570 = vmatprep.subr.mxu0 0.0
        %1571 = vmatpush2.msra.mxu0 0.0
        %1572 = vmatprep.subr.mxu0 0.0
        %1573 = vmatpush2.msra.mxu0 0.0
        %1574 = vmatprep.subr.mxu0 0.0
        %1575 = vmatpush2.msra.mxu0 0.0
        %1576 = vmatprep.subr.mxu0 0.0
        %1577 = vmatpush2.msra.mxu0 0.0
        %1578 = vmatprep.subr.mxu0 0.0
        %1579 = vmatpush2.msra.mxu0 0.0
        %1580 = vmatprep.subr.mxu0 0.0
        %1581 = vmatpush2.msra.mxu0 0.0
        %1582 = vmatprep.mubr.f32.mxu0 0.0
        %1583 = vmatmul.mubr.f32.gmra.mxu0 %v1513
        %v1584 = vpop.f32.mrf.mxu0
        %v1585 = vadd.f32 0.0, %v1584
        %v1586 = vpop.f32.mrf.mxu0
        %1587 = vmatprep.mubr.f32.mxu0 0.0
        %1588 = vmatmul.mubr.f32.gmra.mxu0 %v1516
        %v1589 = vpop.f32.mrf.mxu0
        %v1590 = vadd.f32 0.0, %v1589
        %v1591 = vpop.f32.mrf.mxu0
        %1592 = vdwg.mxu0
        %v1594 = vsel %vm297, %v1500, 0
        %v1597 = vsel %vm297, %v1501, 0
        %1599 = vmatprep.subr.mxu0 0.0
        %1600 = vmatpush1.msra.mxu0 0.0
        %1601 = vmatprep.subr.mxu0 0.0
        %1602 = vmatpush1.msra.mxu0 0.0
        %1603 = vmatprep.subr.mxu0 0.0
        %1604 = vmatpush1.msra.mxu0 0.0
        %1605 = vmatprep.subr.mxu0 0.0
        %1606 = vmatpush1.msra.mxu0 0.0
        %1607 = vmatprep.subr.mxu0 0.0
        %1608 = vmatpush1.msra.mxu0 0.0
        %1609 = vmatprep.subr.mxu0 0.0
        %1610 = vmatpush1.msra.mxu0 0.0
        %1611 = vmatprep.subr.mxu0 0.0
        %1612 = vmatpush1.msra.mxu0 0.0
        %1613 = vmatprep.subr.mxu0 0.0
        %1614 = vmatpush1.msra.mxu0 0.0
        %1615 = vmatprep.subr.mxu0 0.0
        %1616 = vmatpush1.msra.mxu0 0.0
        %1617 = vmatprep.subr.mxu0 0.0
        %1618 = vmatpush1.msra.mxu0 0.0
        %1619 = vmatprep.subr.mxu0 0.0
        %1620 = vmatpush1.msra.mxu0 0.0
        %1621 = vmatprep.subr.mxu0 0.0
        %1622 = vmatpush1.msra.mxu0 0.0
        %1623 = vmatprep.subr.mxu0 0.0
        %1624 = vmatpush1.msra.mxu0 %v1505
        %1625 = vmatprep.subr.mxu0 0.0
        %1626 = vmatpush1.msra.mxu0 %v1504
        %1627 = vmatprep.subr.mxu0 0.0
        %1628 = vmatpush1.msra.mxu0 %v1503
        %1629 = vmatprep.subr.mxu0 0.0
        %1630 = vmatpush1.msra.mxu0 %v1502
        %1631 = vmatprep.subr.mxu0 0.0
        %1632 = vmatpush2.msra.mxu0 0.0
        %1633 = vmatprep.subr.mxu0 0.0
        %1634 = vmatpush2.msra.mxu0 0.0
        %1635 = vmatprep.subr.mxu0 0.0
        %1636 = vmatpush2.msra.mxu0 0.0
        %1637 = vmatprep.subr.mxu0 0.0
        %1638 = vmatpush2.msra.mxu0 0.0
        %1639 = vmatprep.subr.mxu0 0.0
        %1640 = vmatpush2.msra.mxu0 0.0
        %1641 = vmatprep.subr.mxu0 0.0
        %1642 = vmatpush2.msra.mxu0 0.0
        %1643 = vmatprep.subr.mxu0 0.0
        %1644 = vmatpush2.msra.mxu0 0.0
        %1645 = vmatprep.subr.mxu0 0.0
        %1646 = vmatpush2.msra.mxu0 0.0
        %1647 = vmatprep.subr.mxu0 0.0
        %1648 = vmatpush2.msra.mxu0 0.0
        %1649 = vmatprep.subr.mxu0 0.0
        %1650 = vmatpush2.msra.mxu0 0.0
        %1651 = vmatprep.subr.mxu0 0.0
        %1652 = vmatpush2.msra.mxu0 0.0
        %1653 = vmatprep.subr.mxu0 0.0
        %1654 = vmatpush2.msra.mxu0 0.0
        %1655 = vmatprep.subr.mxu0 0.0
        %1656 = vmatpush2.msra.mxu0 0.0
        %1657 = vmatprep.subr.mxu0 0.0
        %1658 = vmatpush2.msra.mxu0 0.0
        %1659 = vmatprep.subr.mxu0 0.0
        %1660 = vmatpush2.msra.mxu0 0.0
        %1661 = vmatprep.subr.mxu0 0.0
        %1662 = vmatpush2.msra.mxu0 0.0
        %1663 = vmatprep.mubr.f32.mxu0 0.0
        %1664 = vmatmul.mubr.f32.gmra.mxu0 %v1594
        %v1665 = vpop.f32.mrf.mxu0
        %v1666 = vadd.f32 %v1585, %v1665
        %v1667 = vpop.f32.mrf.mxu0
        %1668 = vmatprep.mubr.f32.mxu0 0.0
        %1669 = vmatmul.mubr.f32.gmra.mxu0 %v1597
        %v1670 = vpop.f32.mrf.mxu0
        %v1671 = vadd.f32 %v1590, %v1670
        %v1672 = vpop.f32.mrf.mxu0
        %1673 = vdwg.mxu0
        %v1674 = vld [vmem:[%s276] sm:$0xff]
        %v1675 = vld [vmem:[%s276 + $0x8] sm:$0xff]
        %v1676 = vadd.f32 %v1666, %v1674
        %v1677 = vadd.f32 %v1671, %v1675
        %1678 = vmax.xlane.f32.xlu0 %v1676
        %v1679 = vpop.xlane.xlu0 %1678
        %1680 = vmax.xlane.f32.xlu0 %v1677
        %v1681 = vpop.xlane.xlu0 %1680
        %v1682 = vsub.f32 %v1676, %v1679
        %v1683 = vsub.f32 %v1677, %v1681
        %v1684 = vmul.f32 %v1682, 1.442695
        %v1685 = vpow.pop %v1684
        %v1686 = vmul.f32 %v1683, 1.442695
        %v1687 = vpow.pop %v1686
        %1688 = vadd.xlane.f32.xlu0 %v1685
        %v1689 = vpop.xlane.xlu0 %1688
        %1690 = vadd.xlane.f32.xlu0 %v1687
        %v1691 = vpop.xlane.xlu0 %1690
        %v1692 = vlog2.pop %v1689
        %v1693 = vmul.f32 %v1692, 0.6931472
        %v1694 = vlog2.pop %v1691
        %v1695 = vmul.f32 %v1694, 0.6931472
        %v1696 = vadd.f32 %v1693, %v1679
        %v1697 = vadd.f32 %v1695, %v1681
        %v1698 = vsub.f32 %v1676, %v1696
        %v1699 = vsub.f32 %v1677, %v1697
        %1700 = vst [vmem:[%s269] sm:$0xff] %v1698
        %1701 = vst [vmem:[%s269 + $0x8] sm:$0xff] %v1699
        %s1702 = sand.u32 %s162, 1
        %s1703 = scalar_lea.sflag [#allocation5], %s1702
        %s1704 = sand.u32 %s162, 1
        %s1705 = smul.addr %s1704, 16
        %s1706 = scalar_lea.vmem [#allocation4], %s1705
        // Predicated region
        $region49: #{rnn_forward_sequence.1} parent=43 // pred_check
          %p1707 = pneg %p172
        $region50: #{rnn_forward_sequence.1} parent=43 // pred_check_branch
          %1709 = sbr.rel (%p1707) target = $region52
        $region51: #{rnn_forward_sequence.1} parent=43 // pred_region
          %s1710 = smul.u32 2, %s23
          %s1712 = ssub.s32 256, 256
          %1713 = vsyncadd %s1703, %s1712
          %s1714 = smul.addr %s1710, 128
          %s1715 = scalar_lea.hbm %s6, %s1714
          %s1716 = sshll.u32 %s1706, 4
          %s1717 = int_to_ptr.vmem [resolvable:$true] %s1716
          %1722 = dma.vmem_to_hbm [thread:$0]  %s1717, 256, %s1715, %s1703, 128, 128, 8
        $region52: #{rnn_forward_sequence.1} parent=43 // pred_fallthru
          _
        // Predicated region
        $region53: #{rnn_forward_sequence.1} parent=43 // pred_check
          %p1723 = pneg %p193
        $region54: #{rnn_forward_sequence.1} parent=43 // pred_check_branch
          %1725 = sbr.rel (%p1723) target = $region56
        $region55: #{rnn_forward_sequence.1} parent=43 // pred_region
          %s1727 = ssub.s32 16, 16
          %1728 = vsyncadd [#allocation7], %s1727
          %s1730 = sshll.u32 [#allocation6], 4
          %s1731 = int_to_ptr.vmem [resolvable:$true] %s1730
          %1733 = dma.vmem_to_hbm [thread:$0]  %s1731, 16, %s7, [#allocation7]
        $region56: #{rnn_forward_sequence.1} parent=43 // pred_fallthru
          _
        // Predicated region
        $region57: #{rnn_forward_sequence.1} parent=43 // pred_check
          %p1734 = pneg %p193
        $region58: #{rnn_forward_sequence.1} parent=43 // pred_check_branch
          %1736 = sbr.rel (%p1734) target = $region60
        $region59: #{rnn_forward_sequence.1} parent=43 // pred_region
          %1737 = dma.done [#allocation7], 16
        $region60: #{rnn_forward_sequence.1} parent=43 // pred_fallthru
          _
      $region44: #{rnn_forward_sequence.1} parent=5 // pred_fallthru
        _
      %p1738 = scmp.le.s32.totalorder 2, %s18
      // Predicated region
      $region61: #{rnn_forward_sequence.1} parent=5 // pred_check
        %p1739 = pneg %p1738
      $region62: #{rnn_forward_sequence.1} parent=5 // pred_check_branch
        %1741 = sbr.rel (%p1739) target = $region64
      $region63: #{rnn_forward_sequence.1} parent=5 // pred_region
        %s1742 = ssub.s32 %s18, 2
        // Predicated region
        $region65: #{rnn_forward_sequence.1} parent=63 // pred_check
          %p1743 = pneg %p178
        $region66: #{rnn_forward_sequence.1} parent=63 // pred_check_branch
          %1745 = sbr.rel (%p1743) target = $region68
        $region67: #{rnn_forward_sequence.1} parent=63 // pred_region
          %s1746 = sand.u32 %s163, 1
          %s1747 = scalar_lea.sflag [#allocation5], %s1746
          %s1748 = sand.u32 %s163, 1
          %s1749 = smul.addr %s1748, 16
          %s1750 = scalar_lea.vmem [#allocation4], %s1749
          %1751 = dma.done %s1747, 256
        $region68: #{rnn_forward_sequence.1} parent=63 // pred_fallthru
          _
      $region64: #{rnn_forward_sequence.1} parent=5 // pred_fallthru
        _
    $region6: #{rnn_forward_sequence.1} parent=1 // loop_footer
      %s22 = sadd.s32 1, %s18
    $region7: #{rnn_forward_sequence.1} parent=1 // loop_footer_branch
      %17 = sbr.rel target = $region3
    $region8: #{rnn_forward_sequence.1} parent=1 // loop_exit
      _
    %1752 = vsyncpa [#allocation5], 1
    %s1753 = scalar_lea.sflag [#allocation5], 1
    %1754 = vsyncpa %s1753, 1
    %1755 = vsyncpa [#allocation7], 1

</llo_original>
